<compile_context>
chip_gen: v7x
topology: tpu7x:2x2x1
jax: 0.10.0
libtpu: 0.0.40
codegen_flags: <defaults>
</compile_context>

<pallas_src>
import functools
import math

import jax
import jax.numpy as jnp
import numpy as np
from jax.experimental import pallas as pl
from jax.experimental.pallas import tpu as pltpu


def _layernorm(x, w, b, eps):
    mu = jnp.mean(x, axis=-1, keepdims=True)
    xc = x - mu
    var = jnp.mean(xc * xc, axis=-1, keepdims=True)
    return xc * jax.lax.rsqrt(var + eps) * w + b


def gpt2_block_kernel(x_ref,
                      ln1w_ref, ln1b_ref,
                      wqkv_ref, bqkv_ref,
                      wo_ref, bo_ref,
                      ln2w_ref, ln2b_ref,
                      wfc_ref, bfc_ref,
                      wpr_ref, bpr_ref,
                      out_ref,
                      q_scr, k_scr, v_scr,
                      *, num_heads, head_dim, tq, eps, exp_dtype):
    qt = pl.program_id(1)
    S, H = x_ref.shape
    bf16 = jnp.bfloat16
    scale = 1.0 / math.sqrt(float(head_dim))   # scale_attn_weights=True

    # ---- once per batch element: ln_1 over the full sequence + fused QKV ----
    # NOTE: this carry across the query-tile axis requires that axis to be the
    # innermost, sequentially executed ("arbitrary") grid dimension.
    @pl.when(qt == 0)
    def _():
        xf = x_ref[...]                                              # (S, H) f32
        hf = _layernorm(xf, ln1w_ref[...], ln1b_ref[...], eps).astype(bf16)
        qkv = jnp.dot(hf, wqkv_ref[...],
                      preferred_element_type=jnp.float32) + bqkv_ref[...]   # (S, 3H) f32
        # Per-head split; K stored pre-transposed so the per-tile QK^T is a
        # plain batched matmul; 1/sqrt(hd) folded into Q here (once per batch).
        # TODO(synk): replace the per-head lane-sliced stores with one
        # reshape/einshape into a (3, NH, S, hd) scratch slab.
        for hi in range(num_heads):
            lo = hi * head_dim
            q_scr[hi] = (qkv[:, lo:lo + head_dim] * scale).astype(bf16)       # (S, hd)
            k_scr[hi] = qkv[:, H + lo:H + lo + head_dim].T.astype(bf16)       # (hd, S)
            v_scr[hi] = qkv[:, 2 * H + lo:2 * H + lo + head_dim].astype(bf16)  # (S, hd)

    q_off = pl.multiple_of(qt * tq, tq)
    x_q = x_ref[pl.ds(q_off, tq), :]                                 # residual tile, f32

    q3 = q_scr[:, pl.ds(q_off, tq), :]                               # (NH, tq, hd) bf16 (pre-scaled)

    # ---- attention: batched over heads, all matmuls on the MXU ----
    s = jnp.einsum('hqd,hdk->hqk', q3, k_scr[...],
                   preferred_element_type=jnp.float32)               # (NH, tq, S) f32

    row = q_off + jax.lax.broadcasted_iota(jnp.int32, (tq, S), 0)
    col = jax.lax.broadcasted_iota(jnp.int32, (tq, S), 1)
    s = jnp.where((col <= row)[None, :, :], s, -1e30)                # finite mask (NaN-safe)

    m = jnp.max(s, axis=-1, keepdims=True)                           # f32 row max
    p = jnp.exp((s - m).astype(exp_dtype))                           # bf16 EUP exp (v6e/v7x)
    l = jnp.sum(p.astype(jnp.float32), axis=-1, keepdims=True)       # f32 row sums

    ctx = jnp.einsum('hqk,hkd->hqd', p.astype(bf16), v_scr[...],
                     preferred_element_type=jnp.float32)             # (NH, tq, hd) f32
    # normalize after PV (approx reciprocal on the EUP; ~2^-12 rel error)
    ctx = ctx * pl.reciprocal(l, approx=True)

    # ---- c_proj without a merged-heads VMEM round trip:
    # attn_out = concat_h(ctx_h) @ Wo == sum_h ctx_h @ Wo[h]  (f32 accumulation)
    acc = x_q + bo_ref[...]                                          # residual + c_proj bias
    for hi in range(num_heads):
        acc = acc + jnp.dot(ctx[hi].astype(bf16), wo_ref[hi],
                            preferred_element_type=jnp.float32)
    x2 = acc      # attn_dropout / resid_dropout: identity in eval mode

    # ---- ln_2 + MLP ----
    h2 = _layernorm(x2, ln2w_ref[...], ln2b_ref[...], eps).astype(bf16)
    f = jnp.dot(h2, wfc_ref[...],
                preferred_element_type=jnp.float32) + bfc_ref[...]
    f = jax.nn.gelu(f, approximate=True)                             # tanh GELU (EUP)
    f = jnp.dot(f.astype(bf16), wpr_ref[...],
                preferred_element_type=jnp.float32) + bpr_ref[...]
    # mlp dropout: identity in eval mode.

    out_ref[...] = x2 + f


def gpt2_block(x, params, *, num_heads, eps=1e-5, tq=None, bf16_softmax_exp=None):
    B, S, H = x.shape
    assert H % num_heads == 0
    head_dim = H // num_heads
    inner = params["wfc"].shape[1]

    if tq is None:
        if S % 256 == 0:
            tq = 256
        elif S % 128 == 0:
            tq = 128
        else:
            tq = S
    assert S % tq == 0
    n_qt = S // tq

    # v5e has no bf16 EUP -> keep the softmax exp in f32 there.
    if bf16_softmax_exp is None:
        try:
            kind = jax.devices()[0].device_kind.lower()
        except Exception:
            kind = ""
        bf16_softmax_exp = not ("v5 lite" in kind or "v5e" in kind or "v5litepod" in kind)
    exp_dtype = jnp.bfloat16 if bf16_softmax_exp else jnp.float32

    bf16 = jnp.bfloat16
    # fuse Q|K|V into one (H, 3H) bf16 weight; biases stay f32
    wqkv = jnp.concatenate([params["wq"], params["wk"], params["wv"]], axis=1).astype(bf16)
    bqkv = jnp.concatenate([params["bq"], params["bk"], params["bv"]], axis=1)
    # c_proj weight reshaped per-head so the kernel never materializes merged heads
    wo3 = params["wo"].reshape(num_heads, head_dim, H).astype(bf16)
    wfc = params["wfc"].astype(bf16)
    wpr = params["wpr"].astype(bf16)

    kernel = functools.partial(gpt2_block_kernel,
                               num_heads=num_heads, head_dim=head_dim,
                               tq=tq, eps=eps, exp_dtype=exp_dtype)

    # Constant-index weights/biases: single-buffered (no overlap benefit from
    # double-buffering; halves their resident VMEM).
    def rep(shape):
        nd = len(shape)
        return pl.BlockSpec(shape, lambda b, q, _n=nd: (0,) * _n,
                            pipeline_mode=pl.Buffered(1))

    in_specs = [
        pl.BlockSpec((None, S, H), lambda b, q: (b, 0, 0)),   # x: full seq (residual + K/V source)
        rep((1, H)), rep((1, H)),                              # ln_1 w, b
        rep((H, 3 * H)), rep((1, 3 * H)),                      # fused c_attn (q|k|v)
        rep((num_heads, head_dim, H)), rep((1, H)),            # attn c_proj (per-head) + bias
        rep((1, H)), rep((1, H)),                              # ln_2 w, b
        rep((H, inner)), rep((1, inner)),                      # mlp c_fc
        rep((inner, H)), rep((1, H)),                          # mlp c_proj
    ]
    out_spec = pl.BlockSpec((None, tq, H), lambda b, q: (b, q, 0))

    scratch = [
        pltpu.VMEM((num_heads, S, head_dim), bf16),            # Q (per-head, pre-scaled)
        pltpu.VMEM((num_heads, head_dim, S), bf16),            # K^T (per-head)
        pltpu.VMEM((num_heads, S, head_dim), bf16),            # V (per-head)
    ]

    # VMEM budget per chip generation (v5e/v6e 128 MiB, v7x 64 MiB), with headroom.
    try:
        vmem_cap = int(pltpu.get_tpu_info().vmem_capacity_bytes)
    except Exception:
        vmem_cap = 64 * 1024 * 1024
    vmem_limit = max(32 << 20, min(int(vmem_cap * 0.875), 112 << 20))

    # Advisory cost estimate so XLA schedules surrounding ops sensibly.
    flops = int(B * (2 * S * H * 3 * H            # qkv projection
                     + 4 * S * S * H              # QK^T + PV
                     + 2 * S * H * H              # c_proj
                     + 4 * S * H * inner))        # mlp fc + proj
    transcendentals = int(B * (num_heads * S * S + S * inner))
    bytes_accessed = int(2 * B * S * H * 4
                         + 2 * (4 * H * H + 2 * H * inner)
                         + 4 * (7 * H + inner))
    cost = pl.CostEstimate(flops=flops, transcendentals=transcendentals,
                           bytes_accessed=bytes_accessed)

    return pl.pallas_call(
        kernel,
        out_shape=jax.ShapeDtypeStruct((B, S, H), jnp.float32),
        grid_spec=pltpu.PrefetchScalarGridSpec(
            num_scalar_prefetch=0,
            grid=(B, n_qt),
            in_specs=in_specs,
            out_specs=out_spec,
            scratch_shapes=scratch,
        ),
        compiler_params=pltpu.CompilerParams(
            # query-tile axis carries the K/V scratch -> must stay "arbitrary"
            # (sequential); batch axis is safe to shard across TensorCores.
            dimension_semantics=("parallel", "arbitrary"),
            vmem_limit_bytes=vmem_limit,
        ),
        cost_estimate=cost,
    )(x,
      params["ln1w"], params["ln1b"],
      wqkv, bqkv,
      wo3, params["bo"],
      params["ln2w"], params["ln2b"],
      wfc, params["bfc"],
      wpr, params["bpr"])


def gpt2_block_ref(x, params, *, num_heads, eps=1e-5):
    """Pure-JAX f32 reference mirroring the PyTorch GPT2Block forward (eval mode)."""
    B, S, H = x.shape
    hd = H // num_heads

    def ln(t, w, b):
        mu = t.mean(-1, keepdims=True)
        var = ((t - mu) ** 2).mean(-1, keepdims=True)
        return (t - mu) / jnp.sqrt(var + eps) * w + b

    res = x
    h = ln(x, params["ln1w"], params["ln1b"])
    q = h @ params["wq"] + params["bq"]
    k = h @ params["wk"] + params["bk"]
    v = h @ params["wv"] + params["bv"]

    def split(t):
        return t.reshape(B, S, num_heads, hd).transpose(0, 2, 1, 3)

    q, k, v = split(q), split(k), split(v)
    attn = jnp.einsum("bhqd,bhkd->bhqk", q, k) / math.sqrt(hd)
    causal = jnp.tril(jnp.ones((S, S), bool))
    attn = jnp.where(causal[None, None], attn, -jnp.inf)
    p = jax.nn.softmax(attn, axis=-1)
    ctx = jnp.einsum("bhqk,bhkd->bhqd", p, v)
    ctx = ctx.transpose(0, 2, 1, 3).reshape(B, S, H)
    attn_out = ctx @ params["wo"] + params["bo"]
    x = attn_out + res

    res2 = x
    h2 = ln(x, params["ln2w"], params["ln2b"])
    f = h2 @ params["wfc"] + params["bfc"]
    f = 0.5 * f * (1.0 + jax.lax.erf(f / math.sqrt(2.0)))   # nn.GELU() exact erf
    f = f @ params["wpr"] + params["bpr"]
    return res2 + f


def make_params(key, H, inner):
    ks = jax.random.split(key, 16)
    n = lambda k, shape, s: (s * jax.random.normal(k, shape)).astype(jnp.float32)
    return {
        "ln1w": (1.0 + n(ks[0], (1, H), 0.1)), "ln1b": n(ks[1], (1, H), 0.01),
        "wq": n(ks[2], (H, H), 0.02), "bq": n(ks[3], (1, H), 0.01),
        "wk": n(ks[4], (H, H), 0.02), "bk": n(ks[5], (1, H), 0.01),
        "wv": n(ks[6], (H, H), 0.02), "bv": n(ks[7], (1, H), 0.01),
        "wo": n(ks[8], (H, H), 0.02), "bo": n(ks[9], (1, H), 0.01),
        "ln2w": (1.0 + n(ks[10], (1, H), 0.1)), "ln2b": n(ks[11], (1, H), 0.01),
        "wfc": n(ks[12], (H, inner), 0.02), "bfc": n(ks[13], (1, inner), 0.01),
        "wpr": n(ks[14], (inner, H), 0.02), "bpr": n(ks[15], (1, H), 0.01),
    }


if __name__ == "__main__":
    # small GPT-2-like config: hidden=32, heads=4, seq=block_size=8, inner=4*hidden
    B, S, H, NH = 2, 8, 32, 4
    INNER = 4 * H

    key = jax.random.PRNGKey(0)
    kx, kp = jax.random.split(key)
    x = jax.random.normal(kx, (B, S, H), dtype=jnp.float32)
    params = make_params(kp, H, INNER)

    out = gpt2_block(x, params, num_heads=NH)
    out = jax.block_until_ready(out)

    ref = gpt2_block_ref(x, params, num_heads=NH)
    # bf16 MXU inputs, bf16 softmax exp, approx reciprocal, tanh-GELU
    # -> looser tolerance than a pure-f32 comparison
    np.testing.assert_allclose(np.asarray(out), np.asarray(ref), rtol=2e-2, atol=2e-2)

    print("KERNEL_OK")
</pallas_src>

<mosaic_0001>
module attributes {stable_mosaic.version = 11 : i64} {
  func.func @gpt2_block_kernel(%arg0: i32, %arg1: i32, %arg2: memref<1x8x32xf32, #tpu.memory_space<vmem>>, %arg3: memref<1x32xf32, #tpu.memory_space<vmem>>, %arg4: memref<1x32xf32, #tpu.memory_space<vmem>>, %arg5: memref<32x96xbf16, #tpu.memory_space<vmem>>, %arg6: memref<1x96xf32, #tpu.memory_space<vmem>>, %arg7: memref<4x8x32xbf16, #tpu.memory_space<vmem>>, %arg8: memref<1x32xf32, #tpu.memory_space<vmem>>, %arg9: memref<1x32xf32, #tpu.memory_space<vmem>>, %arg10: memref<1x32xf32, #tpu.memory_space<vmem>>, %arg11: memref<32x128xbf16, #tpu.memory_space<vmem>>, %arg12: memref<1x128xf32, #tpu.memory_space<vmem>>, %arg13: memref<128x32xbf16, #tpu.memory_space<vmem>>, %arg14: memref<1x32xf32, #tpu.memory_space<vmem>>, %arg15: memref<1x8x32xf32, #tpu.memory_space<vmem>>, %arg16: memref<4x8x8xbf16, #tpu.memory_space<vmem>>, %arg17: memref<4x8x8xbf16, #tpu.memory_space<vmem>>, %arg18: memref<4x8x8xbf16, #tpu.memory_space<vmem>>) attributes {dimension_semantics = [#tpu.dimension_semantics<parallel>, #tpu.dimension_semantics<arbitrary>], iteration_bounds = array<i64: 2, 1>, scalar_prefetch = 0 : i64, scratch_operands = 3 : i64, tpu.core_type = #tpu.core_type<tc>, window_params = [{transform_indices = @transform_0, window_bounds = array<i64: 1, 8, 32>}, {pipeline_mode = #tpu.pipeline_mode<synchronous>, transform_indices = @transform_1, window_bounds = array<i64: 1, 32>}, {pipeline_mode = #tpu.pipeline_mode<synchronous>, transform_indices = @transform_2, window_bounds = array<i64: 1, 32>}, {pipeline_mode = #tpu.pipeline_mode<synchronous>, transform_indices = @transform_3, window_bounds = array<i64: 32, 96>}, {pipeline_mode = #tpu.pipeline_mode<synchronous>, transform_indices = @transform_4, window_bounds = array<i64: 1, 96>}, {pipeline_mode = #tpu.pipeline_mode<synchronous>, transform_indices = @transform_5, window_bounds = array<i64: 4, 8, 32>}, {pipeline_mode = #tpu.pipeline_mode<synchronous>, transform_indices = @transform_6, window_bounds = array<i64: 1, 32>}, {pipeline_mode = #tpu.pipeline_mode<synchronous>, transform_indices = @transform_7, window_bounds = array<i64: 1, 32>}, {pipeline_mode = #tpu.pipeline_mode<synchronous>, transform_indices = @transform_8, window_bounds = array<i64: 1, 32>}, {pipeline_mode = #tpu.pipeline_mode<synchronous>, transform_indices = @transform_9, window_bounds = array<i64: 32, 128>}, {pipeline_mode = #tpu.pipeline_mode<synchronous>, transform_indices = @transform_10, window_bounds = array<i64: 1, 128>}, {pipeline_mode = #tpu.pipeline_mode<synchronous>, transform_indices = @transform_11, window_bounds = array<i64: 128, 32>}, {pipeline_mode = #tpu.pipeline_mode<synchronous>, transform_indices = @transform_12, window_bounds = array<i64: 1, 32>}, {transform_indices = @transform_13, window_bounds = array<i64: 1, 8, 32>}]} {
    %c0_i32 = arith.constant 0 : i32
    %0 = arith.cmpi eq, %arg1, %c0_i32 : i32
    %1 = arith.extui %0 : i1 to i32
    %c0_i32_0 = arith.constant 0 : i32
    %2 = arith.cmpi ne, %1, %c0_i32_0 : i32
    scf.if %2 {
      %c0_55 = arith.constant 0 : index
      %c0_56 = arith.constant 0 : index
      %c0_57 = arith.constant 0 : index
      %118 = vector.load %arg2[%c0_55, %c0_56, %c0_57] : memref<1x8x32xf32, #tpu.memory_space<vmem>>, vector<1x8x32xf32>
      %119 = vector.shape_cast %118 : vector<1x8x32xf32> to vector<8x32xf32>
      %c0_58 = arith.constant 0 : index
      %c0_59 = arith.constant 0 : index
      %120 = vector.load %arg3[%c0_58, %c0_59] : memref<1x32xf32, #tpu.memory_space<vmem>>, vector<1x32xf32>
      %c0_60 = arith.constant 0 : index
      %c0_61 = arith.constant 0 : index
      %121 = vector.load %arg4[%c0_60, %c0_61] : memref<1x32xf32, #tpu.memory_space<vmem>>, vector<1x32xf32>
      %cst_62 = arith.constant dense<0.000000e+00> : vector<8xf32>
      %122 = vector.multi_reduction <add>, %119, %cst_62 [1] : vector<8x32xf32> to vector<8xf32>
      %123 = vector.shape_cast %122 : vector<8xf32> to vector<8x1xf32>
      %cst_63 = arith.constant 3.200000e+01 : f32
      %124 = vector.broadcast %cst_63 : f32 to vector<8x1xf32>
      %125 = arith.divf %123, %124 : vector<8x1xf32>
      %126 = vector.broadcast %125 : vector<8x1xf32> to vector<8x32xf32>
      %127 = arith.subf %119, %126 : vector<8x32xf32>
      %128 = arith.mulf %127, %127 : vector<8x32xf32>
      %cst_64 = arith.constant dense<0.000000e+00> : vector<8xf32>
      %129 = vector.multi_reduction <add>, %128, %cst_64 [1] : vector<8x32xf32> to vector<8xf32>
      %130 = vector.shape_cast %129 : vector<8xf32> to vector<8x1xf32>
      %cst_65 = arith.constant 3.200000e+01 : f32
      %131 = vector.broadcast %cst_65 : f32 to vector<8x1xf32>
      %132 = arith.divf %130, %131 : vector<8x1xf32>
      %cst_66 = arith.constant 9.99999974E-6 : f32
      %133 = vector.broadcast %cst_66 : f32 to vector<8x1xf32>
      %134 = arith.addf %132, %133 : vector<8x1xf32>
      %135 = math.rsqrt %134 : vector<8x1xf32>
      %136 = vector.broadcast %135 : vector<8x1xf32> to vector<8x32xf32>
      %137 = arith.mulf %127, %136 : vector<8x32xf32>
      %138 = vector.broadcast %120 : vector<1x32xf32> to vector<8x32xf32>
      %139 = arith.mulf %137, %138 : vector<8x32xf32>
      %140 = vector.broadcast %121 : vector<1x32xf32> to vector<8x32xf32>
      %141 = arith.addf %139, %140 : vector<8x32xf32>
      %142 = arith.truncf %141 : vector<8x32xf32> to vector<8x32xbf16>
      %c0_67 = arith.constant 0 : index
      %c0_68 = arith.constant 0 : index
      %143 = vector.load %arg5[%c0_67, %c0_68] : memref<32x96xbf16, #tpu.memory_space<vmem>>, vector<32x96xbf16>
      %cst_69 = arith.constant dense<0.000000e+00> : vector<8x96xf32>
      %144 = tpu.matmul %142, %143, %cst_69 {dimension_numbers = #tpu.dot_dimension_numbers<[1], [0], [0], [1], [0, 0, 1, 1], [], []>} : vector<8x32xbf16>, vector<32x96xbf16>, vector<8x96xf32> -> vector<8x96xf32>
      %c0_70 = arith.constant 0 : index
      %c0_71 = arith.constant 0 : index
      %145 = vector.load %arg6[%c0_70, %c0_71] : memref<1x96xf32, #tpu.memory_space<vmem>>, vector<1x96xf32>
      %146 = vector.broadcast %145 : vector<1x96xf32> to vector<8x96xf32>
      %147 = arith.addf %144, %146 : vector<8x96xf32>
      %148 = vector.extract_strided_slice %147 {offsets = [0, 0], sizes = [8, 8], strides = [1, 1]} : vector<8x96xf32> to vector<8x8xf32>
      %cst_72 = arith.constant 0.353553385 : f32
      %149 = vector.broadcast %cst_72 : f32 to vector<8x8xf32>
      %150 = arith.mulf %148, %149 : vector<8x8xf32>
      %151 = arith.truncf %150 : vector<8x8xf32> to vector<8x8xbf16>
      %c0_73 = arith.constant 0 : index
      %c0_74 = arith.constant 0 : index
      %c0_75 = arith.constant 0 : index
      %152 = vector.load %arg16[%c0_73, %c0_74, %c0_75] : memref<4x8x8xbf16, #tpu.memory_space<vmem>>, vector<1x8x8xbf16>
      %153 = vector.shape_cast %152 : vector<1x8x8xbf16> to vector<8x8xbf16>
      %154 = vector.shape_cast %151 : vector<8x8xbf16> to vector<1x8x8xbf16>
      tpu.vector_store %arg16[%c0_73, %c0_74, %c0_75], %154 {strides = array<i32>} : memref<4x8x8xbf16, #tpu.memory_space<vmem>>, vector<1x8x8xbf16>,
      %155 = vector.extract_strided_slice %147 {offsets = [0, 32], sizes = [8, 8], strides = [1, 1]} : vector<8x96xf32> to vector<8x8xf32>
      %156 = tpu.transpose %155, [1, 0] : vector<8x8xf32> -> vector<8x8xf32>
      %157 = arith.truncf %156 : vector<8x8xf32> to vector<8x8xbf16>
      %c0_76 = arith.constant 0 : index
      %c0_77 = arith.constant 0 : index
      %c0_78 = arith.constant 0 : index
      %158 = vector.load %arg17[%c0_76, %c0_77, %c0_78] : memref<4x8x8xbf16, #tpu.memory_space<vmem>>, vector<1x8x8xbf16>
      %159 = vector.shape_cast %158 : vector<1x8x8xbf16> to vector<8x8xbf16>
      %160 = vector.shape_cast %157 : vector<8x8xbf16> to vector<1x8x8xbf16>
      tpu.vector_store %arg17[%c0_76, %c0_77, %c0_78], %160 {strides = array<i32>} : memref<4x8x8xbf16, #tpu.memory_space<vmem>>, vector<1x8x8xbf16>,
      %161 = vector.extract_strided_slice %147 {offsets = [0, 64], sizes = [8, 8], strides = [1, 1]} : vector<8x96xf32> to vector<8x8xf32>
      %162 = arith.truncf %161 : vector<8x8xf32> to vector<8x8xbf16>
      %c0_79 = arith.constant 0 : index
      %c0_80 = arith.constant 0 : index
      %c0_81 = arith.constant 0 : index
      %163 = vector.load %arg18[%c0_79, %c0_80, %c0_81] : memref<4x8x8xbf16, #tpu.memory_space<vmem>>, vector<1x8x8xbf16>
      %164 = vector.shape_cast %163 : vector<1x8x8xbf16> to vector<8x8xbf16>
      %165 = vector.shape_cast %162 : vector<8x8xbf16> to vector<1x8x8xbf16>
      tpu.vector_store %arg18[%c0_79, %c0_80, %c0_81], %165 {strides = array<i32>} : memref<4x8x8xbf16, #tpu.memory_space<vmem>>, vector<1x8x8xbf16>,
      %166 = vector.extract_strided_slice %147 {offsets = [0, 8], sizes = [8, 8], strides = [1, 1]} : vector<8x96xf32> to vector<8x8xf32>
      %cst_82 = arith.constant 0.353553385 : f32
      %167 = vector.broadcast %cst_82 : f32 to vector<8x8xf32>
      %168 = arith.mulf %166, %167 : vector<8x8xf32>
      %169 = arith.truncf %168 : vector<8x8xf32> to vector<8x8xbf16>
      %c1_83 = arith.constant 1 : index
      %c0_84 = arith.constant 0 : index
      %c0_85 = arith.constant 0 : index
      %170 = vector.load %arg16[%c1_83, %c0_84, %c0_85] : memref<4x8x8xbf16, #tpu.memory_space<vmem>>, vector<1x8x8xbf16>
      %171 = vector.shape_cast %170 : vector<1x8x8xbf16> to vector<8x8xbf16>
      %172 = vector.shape_cast %169 : vector<8x8xbf16> to vector<1x8x8xbf16>
      tpu.vector_store %arg16[%c1_83, %c0_84, %c0_85], %172 {strides = array<i32>} : memref<4x8x8xbf16, #tpu.memory_space<vmem>>, vector<1x8x8xbf16>,
      %173 = vector.extract_strided_slice %147 {offsets = [0, 40], sizes = [8, 8], strides = [1, 1]} : vector<8x96xf32> to vector<8x8xf32>
      %174 = tpu.transpose %173, [1, 0] : vector<8x8xf32> -> vector<8x8xf32>
      %175 = arith.truncf %174 : vector<8x8xf32> to vector<8x8xbf16>
      %c1_86 = arith.constant 1 : index
      %c0_87 = arith.constant 0 : index
      %c0_88 = arith.constant 0 : index
      %176 = vector.load %arg17[%c1_86, %c0_87, %c0_88] : memref<4x8x8xbf16, #tpu.memory_space<vmem>>, vector<1x8x8xbf16>
      %177 = vector.shape_cast %176 : vector<1x8x8xbf16> to vector<8x8xbf16>
      %178 = vector.shape_cast %175 : vector<8x8xbf16> to vector<1x8x8xbf16>
      tpu.vector_store %arg17[%c1_86, %c0_87, %c0_88], %178 {strides = array<i32>} : memref<4x8x8xbf16, #tpu.memory_space<vmem>>, vector<1x8x8xbf16>,
      %179 = vector.extract_strided_slice %147 {offsets = [0, 72], sizes = [8, 8], strides = [1, 1]} : vector<8x96xf32> to vector<8x8xf32>
      %180 = arith.truncf %179 : vector<8x8xf32> to vector<8x8xbf16>
      %c1_89 = arith.constant 1 : index
      %c0_90 = arith.constant 0 : index
      %c0_91 = arith.constant 0 : index
      %181 = vector.load %arg18[%c1_89, %c0_90, %c0_91] : memref<4x8x8xbf16, #tpu.memory_space<vmem>>, vector<1x8x8xbf16>
      %182 = vector.shape_cast %181 : vector<1x8x8xbf16> to vector<8x8xbf16>
      %183 = vector.shape_cast %180 : vector<8x8xbf16> to vector<1x8x8xbf16>
      tpu.vector_store %arg18[%c1_89, %c0_90, %c0_91], %183 {strides = array<i32>} : memref<4x8x8xbf16, #tpu.memory_space<vmem>>, vector<1x8x8xbf16>,
      %184 = vector.extract_strided_slice %147 {offsets = [0, 16], sizes = [8, 8], strides = [1, 1]} : vector<8x96xf32> to vector<8x8xf32>
      %cst_92 = arith.constant 0.353553385 : f32
      %185 = vector.broadcast %cst_92 : f32 to vector<8x8xf32>
      %186 = arith.mulf %184, %185 : vector<8x8xf32>
      %187 = arith.truncf %186 : vector<8x8xf32> to vector<8x8xbf16>
      %c2_93 = arith.constant 2 : index
      %c0_94 = arith.constant 0 : index
      %c0_95 = arith.constant 0 : index
      %188 = vector.load %arg16[%c2_93, %c0_94, %c0_95] : memref<4x8x8xbf16, #tpu.memory_space<vmem>>, vector<1x8x8xbf16>
      %189 = vector.shape_cast %188 : vector<1x8x8xbf16> to vector<8x8xbf16>
      %190 = vector.shape_cast %187 : vector<8x8xbf16> to vector<1x8x8xbf16>
      tpu.vector_store %arg16[%c2_93, %c0_94, %c0_95], %190 {strides = array<i32>} : memref<4x8x8xbf16, #tpu.memory_space<vmem>>, vector<1x8x8xbf16>,
      %191 = vector.extract_strided_slice %147 {offsets = [0, 48], sizes = [8, 8], strides = [1, 1]} : vector<8x96xf32> to vector<8x8xf32>
      %192 = tpu.transpose %191, [1, 0] : vector<8x8xf32> -> vector<8x8xf32>
      %193 = arith.truncf %192 : vector<8x8xf32> to vector<8x8xbf16>
      %c2_96 = arith.constant 2 : index
      %c0_97 = arith.constant 0 : index
      %c0_98 = arith.constant 0 : index
      %194 = vector.load %arg17[%c2_96, %c0_97, %c0_98] : memref<4x8x8xbf16, #tpu.memory_space<vmem>>, vector<1x8x8xbf16>
      %195 = vector.shape_cast %194 : vector<1x8x8xbf16> to vector<8x8xbf16>
      %196 = vector.shape_cast %193 : vector<8x8xbf16> to vector<1x8x8xbf16>
      tpu.vector_store %arg17[%c2_96, %c0_97, %c0_98], %196 {strides = array<i32>} : memref<4x8x8xbf16, #tpu.memory_space<vmem>>, vector<1x8x8xbf16>,
      %197 = vector.extract_strided_slice %147 {offsets = [0, 80], sizes = [8, 8], strides = [1, 1]} : vector<8x96xf32> to vector<8x8xf32>
      %198 = arith.truncf %197 : vector<8x8xf32> to vector<8x8xbf16>
      %c2_99 = arith.constant 2 : index
      %c0_100 = arith.constant 0 : index
      %c0_101 = arith.constant 0 : index
      %199 = vector.load %arg18[%c2_99, %c0_100, %c0_101] : memref<4x8x8xbf16, #tpu.memory_space<vmem>>, vector<1x8x8xbf16>
      %200 = vector.shape_cast %199 : vector<1x8x8xbf16> to vector<8x8xbf16>
      %201 = vector.shape_cast %198 : vector<8x8xbf16> to vector<1x8x8xbf16>
      tpu.vector_store %arg18[%c2_99, %c0_100, %c0_101], %201 {strides = array<i32>} : memref<4x8x8xbf16, #tpu.memory_space<vmem>>, vector<1x8x8xbf16>,
      %202 = vector.extract_strided_slice %147 {offsets = [0, 24], sizes = [8, 8], strides = [1, 1]} : vector<8x96xf32> to vector<8x8xf32>
      %cst_102 = arith.constant 0.353553385 : f32
      %203 = vector.broadcast %cst_102 : f32 to vector<8x8xf32>
      %204 = arith.mulf %202, %203 : vector<8x8xf32>
      %205 = arith.truncf %204 : vector<8x8xf32> to vector<8x8xbf16>
      %c3_103 = arith.constant 3 : index
      %c0_104 = arith.constant 0 : index
      %c0_105 = arith.constant 0 : index
      %206 = vector.load %arg16[%c3_103, %c0_104, %c0_105] : memref<4x8x8xbf16, #tpu.memory_space<vmem>>, vector<1x8x8xbf16>
      %207 = vector.shape_cast %206 : vector<1x8x8xbf16> to vector<8x8xbf16>
      %208 = vector.shape_cast %205 : vector<8x8xbf16> to vector<1x8x8xbf16>
      tpu.vector_store %arg16[%c3_103, %c0_104, %c0_105], %208 {strides = array<i32>} : memref<4x8x8xbf16, #tpu.memory_space<vmem>>, vector<1x8x8xbf16>,
      %209 = vector.extract_strided_slice %147 {offsets = [0, 56], sizes = [8, 8], strides = [1, 1]} : vector<8x96xf32> to vector<8x8xf32>
      %210 = tpu.transpose %209, [1, 0] : vector<8x8xf32> -> vector<8x8xf32>
      %211 = arith.truncf %210 : vector<8x8xf32> to vector<8x8xbf16>
      %c3_106 = arith.constant 3 : index
      %c0_107 = arith.constant 0 : index
      %c0_108 = arith.constant 0 : index
      %212 = vector.load %arg17[%c3_106, %c0_107, %c0_108] : memref<4x8x8xbf16, #tpu.memory_space<vmem>>, vector<1x8x8xbf16>
      %213 = vector.shape_cast %212 : vector<1x8x8xbf16> to vector<8x8xbf16>
      %214 = vector.shape_cast %211 : vector<8x8xbf16> to vector<1x8x8xbf16>
      tpu.vector_store %arg17[%c3_106, %c0_107, %c0_108], %214 {strides = array<i32>} : memref<4x8x8xbf16, #tpu.memory_space<vmem>>, vector<1x8x8xbf16>,
      %215 = vector.extract_strided_slice %147 {offsets = [0, 88], sizes = [8, 8], strides = [1, 1]} : vector<8x96xf32> to vector<8x8xf32>
      %216 = arith.truncf %215 : vector<8x8xf32> to vector<8x8xbf16>
      %c3_109 = arith.constant 3 : index
      %c0_110 = arith.constant 0 : index
      %c0_111 = arith.constant 0 : index
      %217 = vector.load %arg18[%c3_109, %c0_110, %c0_111] : memref<4x8x8xbf16, #tpu.memory_space<vmem>>, vector<1x8x8xbf16>
      %218 = vector.shape_cast %217 : vector<1x8x8xbf16> to vector<8x8xbf16>
      %219 = vector.shape_cast %216 : vector<8x8xbf16> to vector<1x8x8xbf16>
      tpu.vector_store %arg18[%c3_109, %c0_110, %c0_111], %219 {strides = array<i32>} : memref<4x8x8xbf16, #tpu.memory_space<vmem>>, vector<1x8x8xbf16>,
    } else {
    }
    %c8_i32 = arith.constant 8 : i32
    %3 = arith.muli %arg1, %c8_i32 : i32
    %4 = tpu.assume_multiple %3, 8 : i32
    %c0 = arith.constant 0 : index
    %5 = arith.index_cast %4 : i32 to index
    %c0_1 = arith.constant 0 : index
    %6 = vector.load %arg2[%c0, %5, %c0_1] : memref<1x8x32xf32, #tpu.memory_space<vmem>>, vector<1x8x32xf32>
    %7 = vector.shape_cast %6 : vector<1x8x32xf32> to vector<8x32xf32>
    %c0_2 = arith.constant 0 : index
    %8 = arith.index_cast %4 : i32 to index
    %c0_3 = arith.constant 0 : index
    %9 = vector.load %arg16[%c0_2, %8, %c0_3] : memref<4x8x8xbf16, #tpu.memory_space<vmem>>, vector<4x8x8xbf16>
    %c0_4 = arith.constant 0 : index
    %c0_5 = arith.constant 0 : index
    %c0_6 = arith.constant 0 : index
    %10 = vector.load %arg17[%c0_4, %c0_5, %c0_6] : memref<4x8x8xbf16, #tpu.memory_space<vmem>>, vector<4x8x8xbf16>
    "tpu.trace_start"() <{level = 10 : i32, message = "hqd,hdk->hqk"}> : () -> ()
    %cst = arith.constant dense<0.000000e+00> : vector<4x8x8xf32>
    %11 = tpu.matmul %9, %10, %cst {dimension_numbers = #tpu.dot_dimension_numbers<[2], [1], [1], [2], [0, 0, 0, 1, 1, 2], [0], [0]>} : vector<4x8x8xbf16>, vector<4x8x8xbf16>, vector<4x8x8xf32> -> vector<4x8x8xf32>
    "tpu.trace_stop"() : () -> ()
    %12 = tpu.iota {dimensions = array<i32: 0>} : vector<8x8xi32>
    %13 = vector.broadcast %4 : i32 to vector<8x8xi32>
    %14 = arith.addi %13, %12 : vector<8x8xi32>
    %15 = tpu.iota {dimensions = array<i32: 1>} : vector<8x8xi32>
    %16 = arith.cmpi sle, %15, %14 : vector<8x8xi32>
    %17 = vector.shape_cast %16 : vector<8x8xi1> to vector<1x8x8xi1>
    %cst_7 = arith.constant -1.000000e+30 : f32
    %18 = vector.shape_cast %17 : vector<1x8x8xi1> to vector<1x8x8xi1>
    %19 = vector.broadcast %18 : vector<1x8x8xi1> to vector<4x8x8xi1>
    %20 = vector.broadcast %cst_7 : f32 to vector<4x8x8xf32>
    %21 = arith.select %19, %11, %20 : vector<4x8x8xi1>, vector<4x8x8xf32>
    %cst_8 = arith.constant dense<0xFF800000> : vector<4x8xf32>
    %22 = vector.multi_reduction <maximumf>, %21, %cst_8 [2] : vector<4x8x8xf32> to vector<4x8xf32>
    %23 = vector.shape_cast %22 : vector<4x8xf32> to vector<4x8x1xf32>
    %24 = vector.broadcast %23 : vector<4x8x1xf32> to vector<4x8x8xf32>
    %25 = arith.subf %21, %24 : vector<4x8x8xf32>
    %26 = arith.truncf %25 : vector<4x8x8xf32> to vector<4x8x8xbf16>
    %27 = math.exp %26 : vector<4x8x8xbf16>
    %28 = arith.extf %27 : vector<4x8x8xbf16> to vector<4x8x8xf32>
    %cst_9 = arith.constant dense<0.000000e+00> : vector<4x8xf32>
    %29 = vector.multi_reduction <add>, %28, %cst_9 [2] : vector<4x8x8xf32> to vector<4x8xf32>
    %30 = vector.shape_cast %29 : vector<4x8xf32> to vector<4x8x1xf32>
    %c0_10 = arith.constant 0 : index
    %c0_11 = arith.constant 0 : index
    %c0_12 = arith.constant 0 : index
    %31 = vector.load %arg18[%c0_10, %c0_11, %c0_12] : memref<4x8x8xbf16, #tpu.memory_space<vmem>>, vector<4x8x8xbf16>
    "tpu.trace_start"() <{level = 10 : i32, message = "hqk,hkd->hqd"}> : () -> ()
    %cst_13 = arith.constant dense<0.000000e+00> : vector<4x8x8xf32>
    %32 = tpu.matmul %27, %31, %cst_13 {dimension_numbers = #tpu.dot_dimension_numbers<[2], [1], [1], [2], [0, 0, 0, 1, 1, 2], [0], [0]>} : vector<4x8x8xbf16>, vector<4x8x8xbf16>, vector<4x8x8xf32> -> vector<4x8x8xf32>
    "tpu.trace_stop"() : () -> ()
    %33 = tpu.reciprocal %30 {approx = true} : vector<4x8x1xf32> -> vector<4x8x1xf32>
    %34 = vector.broadcast %33 : vector<4x8x1xf32> to vector<4x8x8xf32>
    %35 = arith.mulf %32, %34 : vector<4x8x8xf32>
    %c0_14 = arith.constant 0 : index
    %c0_15 = arith.constant 0 : index
    %36 = vector.load %arg8[%c0_14, %c0_15] : memref<1x32xf32, #tpu.memory_space<vmem>>, vector<1x32xf32>
    %37 = vector.broadcast %36 : vector<1x32xf32> to vector<8x32xf32>
    %38 = arith.addf %7, %37 : vector<8x32xf32>
    %39 = vector.extract_strided_slice %35 {offsets = [0, 0, 0], sizes = [1, 8, 8], strides = [1, 1, 1]} : vector<4x8x8xf32> to vector<1x8x8xf32>
    %40 = vector.shape_cast %39 : vector<1x8x8xf32> to vector<8x8xf32>
    %41 = arith.truncf %40 : vector<8x8xf32> to vector<8x8xbf16>
    %c0_16 = arith.constant 0 : index
    %c0_17 = arith.constant 0 : index
    %c0_18 = arith.constant 0 : index
    %42 = vector.load %arg7[%c0_16, %c0_17, %c0_18] : memref<4x8x32xbf16, #tpu.memory_space<vmem>>, vector<1x8x32xbf16>
    %43 = vector.shape_cast %42 : vector<1x8x32xbf16> to vector<8x32xbf16>
    %cst_19 = arith.constant dense<0.000000e+00> : vector<8x32xf32>
    %44 = tpu.matmul %41, %43, %cst_19 {dimension_numbers = #tpu.dot_dimension_numbers<[1], [0], [0], [1], [0, 0, 1, 1], [], []>} : vector<8x8xbf16>, vector<8x32xbf16>, vector<8x32xf32> -> vector<8x32xf32>
    %45 = arith.addf %38, %44 : vector<8x32xf32>
    %46 = vector.extract_strided_slice %35 {offsets = [1, 0, 0], sizes = [1, 8, 8], strides = [1, 1, 1]} : vector<4x8x8xf32> to vector<1x8x8xf32>
    %47 = vector.shape_cast %46 : vector<1x8x8xf32> to vector<8x8xf32>
    %48 = arith.truncf %47 : vector<8x8xf32> to vector<8x8xbf16>
    %c1 = arith.constant 1 : index
    %c0_20 = arith.constant 0 : index
    %c0_21 = arith.constant 0 : index
    %49 = vector.load %arg7[%c1, %c0_20, %c0_21] : memref<4x8x32xbf16, #tpu.memory_space<vmem>>, vector<1x8x32xbf16>
    %50 = vector.shape_cast %49 : vector<1x8x32xbf16> to vector<8x32xbf16>
    %cst_22 = arith.constant dense<0.000000e+00> : vector<8x32xf32>
    %51 = tpu.matmul %48, %50, %cst_22 {dimension_numbers = #tpu.dot_dimension_numbers<[1], [0], [0], [1], [0, 0, 1, 1], [], []>} : vector<8x8xbf16>, vector<8x32xbf16>, vector<8x32xf32> -> vector<8x32xf32>
    %52 = arith.addf %45, %51 : vector<8x32xf32>
    %53 = vector.extract_strided_slice %35 {offsets = [2, 0, 0], sizes = [1, 8, 8], strides = [1, 1, 1]} : vector<4x8x8xf32> to vector<1x8x8xf32>
    %54 = vector.shape_cast %53 : vector<1x8x8xf32> to vector<8x8xf32>
    %55 = arith.truncf %54 : vector<8x8xf32> to vector<8x8xbf16>
    %c2 = arith.constant 2 : index
    %c0_23 = arith.constant 0 : index
    %c0_24 = arith.constant 0 : index
    %56 = vector.load %arg7[%c2, %c0_23, %c0_24] : memref<4x8x32xbf16, #tpu.memory_space<vmem>>, vector<1x8x32xbf16>
    %57 = vector.shape_cast %56 : vector<1x8x32xbf16> to vector<8x32xbf16>
    %cst_25 = arith.constant dense<0.000000e+00> : vector<8x32xf32>
    %58 = tpu.matmul %55, %57, %cst_25 {dimension_numbers = #tpu.dot_dimension_numbers<[1], [0], [0], [1], [0, 0, 1, 1], [], []>} : vector<8x8xbf16>, vector<8x32xbf16>, vector<8x32xf32> -> vector<8x32xf32>
    %59 = arith.addf %52, %58 : vector<8x32xf32>
    %60 = vector.extract_strided_slice %35 {offsets = [3, 0, 0], sizes = [1, 8, 8], strides = [1, 1, 1]} : vector<4x8x8xf32> to vector<1x8x8xf32>
    %61 = vector.shape_cast %60 : vector<1x8x8xf32> to vector<8x8xf32>
    %62 = arith.truncf %61 : vector<8x8xf32> to vector<8x8xbf16>
    %c3 = arith.constant 3 : index
    %c0_26 = arith.constant 0 : index
    %c0_27 = arith.constant 0 : index
    %63 = vector.load %arg7[%c3, %c0_26, %c0_27] : memref<4x8x32xbf16, #tpu.memory_space<vmem>>, vector<1x8x32xbf16>
    %64 = vector.shape_cast %63 : vector<1x8x32xbf16> to vector<8x32xbf16>
    %cst_28 = arith.constant dense<0.000000e+00> : vector<8x32xf32>
    %65 = tpu.matmul %62, %64, %cst_28 {dimension_numbers = #tpu.dot_dimension_numbers<[1], [0], [0], [1], [0, 0, 1, 1], [], []>} : vector<8x8xbf16>, vector<8x32xbf16>, vector<8x32xf32> -> vector<8x32xf32>
    %66 = arith.addf %59, %65 : vector<8x32xf32>
    %c0_29 = arith.constant 0 : index
    %c0_30 = arith.constant 0 : index
    %67 = vector.load %arg9[%c0_29, %c0_30] : memref<1x32xf32, #tpu.memory_space<vmem>>, vector<1x32xf32>
    %c0_31 = arith.constant 0 : index
    %c0_32 = arith.constant 0 : index
    %68 = vector.load %arg10[%c0_31, %c0_32] : memref<1x32xf32, #tpu.memory_space<vmem>>, vector<1x32xf32>
    %cst_33 = arith.constant dense<0.000000e+00> : vector<8xf32>
    %69 = vector.multi_reduction <add>, %66, %cst_33 [1] : vector<8x32xf32> to vector<8xf32>
    %70 = vector.shape_cast %69 : vector<8xf32> to vector<8x1xf32>
    %cst_34 = arith.constant 3.200000e+01 : f32
    %71 = vector.broadcast %cst_34 : f32 to vector<8x1xf32>
    %72 = arith.divf %70, %71 : vector<8x1xf32>
    %73 = vector.broadcast %72 : vector<8x1xf32> to vector<8x32xf32>
    %74 = arith.subf %66, %73 : vector<8x32xf32>
    %75 = arith.mulf %74, %74 : vector<8x32xf32>
    %cst_35 = arith.constant dense<0.000000e+00> : vector<8xf32>
    %76 = vector.multi_reduction <add>, %75, %cst_35 [1] : vector<8x32xf32> to vector<8xf32>
    %77 = vector.shape_cast %76 : vector<8xf32> to vector<8x1xf32>
    %cst_36 = arith.constant 3.200000e+01 : f32
    %78 = vector.broadcast %cst_36 : f32 to vector<8x1xf32>
    %79 = arith.divf %77, %78 : vector<8x1xf32>
    %cst_37 = arith.constant 9.99999974E-6 : f32
    %80 = vector.broadcast %cst_37 : f32 to vector<8x1xf32>
    %81 = arith.addf %79, %80 : vector<8x1xf32>
    %82 = math.rsqrt %81 : vector<8x1xf32>
    %83 = vector.broadcast %82 : vector<8x1xf32> to vector<8x32xf32>
    %84 = arith.mulf %74, %83 : vector<8x32xf32>
    %85 = vector.broadcast %67 : vector<1x32xf32> to vector<8x32xf32>
    %86 = arith.mulf %84, %85 : vector<8x32xf32>
    %87 = vector.broadcast %68 : vector<1x32xf32> to vector<8x32xf32>
    %88 = arith.addf %86, %87 : vector<8x32xf32>
    %89 = arith.truncf %88 : vector<8x32xf32> to vector<8x32xbf16>
    %c0_38 = arith.constant 0 : index
    %c0_39 = arith.constant 0 : index
    %90 = vector.load %arg11[%c0_38, %c0_39] : memref<32x128xbf16, #tpu.memory_space<vmem>>, vector<32x128xbf16>
    %cst_40 = arith.constant dense<0.000000e+00> : vector<8x128xf32>
    %91 = tpu.matmul %89, %90, %cst_40 {dimension_numbers = #tpu.dot_dimension_numbers<[1], [0], [0], [1], [0, 0, 1, 1], [], []>} : vector<8x32xbf16>, vector<32x128xbf16>, vector<8x128xf32> -> vector<8x128xf32>
    %c0_41 = arith.constant 0 : index
    %c0_42 = arith.constant 0 : index
    %92 = vector.load %arg12[%c0_41, %c0_42] : memref<1x128xf32, #tpu.memory_space<vmem>>, vector<1x128xf32>
    %93 = vector.broadcast %92 : vector<1x128xf32> to vector<8x128xf32>
    %94 = arith.addf %91, %93 : vector<8x128xf32>
    %95 = arith.mulf %94, %94 : vector<8x128xf32>
    %96 = arith.mulf %94, %95 : vector<8x128xf32>
    %cst_43 = arith.constant 4.471500e-02 : f32
    %97 = vector.broadcast %cst_43 : f32 to vector<8x128xf32>
    %98 = arith.mulf %97, %96 : vector<8x128xf32>
    %99 = arith.addf %94, %98 : vector<8x128xf32>
    %cst_44 = arith.constant 0.797884583 : f32
    %100 = vector.broadcast %cst_44 : f32 to vector<8x128xf32>
    %101 = arith.mulf %100, %99 : vector<8x128xf32>
    %102 = math.tanh %101 : vector<8x128xf32>
    %cst_45 = arith.constant 1.000000e+00 : f32
    %103 = vector.broadcast %cst_45 : f32 to vector<8x128xf32>
    %104 = arith.addf %103, %102 : vector<8x128xf32>
    %cst_46 = arith.constant 5.000000e-01 : f32
    %105 = vector.broadcast %cst_46 : f32 to vector<8x128xf32>
    %106 = arith.mulf %105, %104 : vector<8x128xf32>
    %107 = arith.mulf %94, %106 : vector<8x128xf32>
    %108 = arith.truncf %107 : vector<8x128xf32> to vector<8x128xbf16>
    %c0_47 = arith.constant 0 : index
    %c0_48 = arith.constant 0 : index
    %109 = vector.load %arg13[%c0_47, %c0_48] : memref<128x32xbf16, #tpu.memory_space<vmem>>, vector<128x32xbf16>
    %cst_49 = arith.constant dense<0.000000e+00> : vector<8x32xf32>
    %110 = tpu.matmul %108, %109, %cst_49 {dimension_numbers = #tpu.dot_dimension_numbers<[1], [0], [0], [1], [0, 0, 1, 1], [], []>} : vector<8x128xbf16>, vector<128x32xbf16>, vector<8x32xf32> -> vector<8x32xf32>
    %c0_50 = arith.constant 0 : index
    %c0_51 = arith.constant 0 : index
    %111 = vector.load %arg14[%c0_50, %c0_51] : memref<1x32xf32, #tpu.memory_space<vmem>>, vector<1x32xf32>
    %112 = vector.broadcast %111 : vector<1x32xf32> to vector<8x32xf32>
    %113 = arith.addf %110, %112 : vector<8x32xf32>
    %114 = arith.addf %66, %113 : vector<8x32xf32>
    %c0_52 = arith.constant 0 : index
    %c0_53 = arith.constant 0 : index
    %c0_54 = arith.constant 0 : index
    %115 = vector.load %arg15[%c0_52, %c0_53, %c0_54] : memref<1x8x32xf32, #tpu.memory_space<vmem>>, vector<1x8x32xf32>
    %116 = vector.shape_cast %115 : vector<1x8x32xf32> to vector<8x32xf32>
    %117 = vector.shape_cast %114 : vector<8x32xf32> to vector<1x8x32xf32>
    tpu.vector_store %arg15[%c0_52, %c0_53, %c0_54], %117 {strides = array<i32>} : memref<1x8x32xf32, #tpu.memory_space<vmem>>, vector<1x8x32xf32>,
    return
  }
  func.func @transform_0(%arg0: i32, %arg1: i32) -> (i32, i32, i32) {
    %c0_i32 = arith.constant 0 : i32
    %c0_i32_0 = arith.constant 0 : i32
    %c0_i32_1 = arith.constant 0 : i32
    return %arg0, %c0_i32, %c0_i32_0 : i32, i32, i32
  }
  func.func @transform_1(%arg0: i32, %arg1: i32) -> (i32, i32) {
    %c0_i32 = arith.constant 0 : i32
    %c0_i32_0 = arith.constant 0 : i32
    %c0_i32_1 = arith.constant 0 : i32
    return %c0_i32, %c0_i32_0 : i32, i32
  }
  func.func @transform_2(%arg0: i32, %arg1: i32) -> (i32, i32) {
    %c0_i32 = arith.constant 0 : i32
    %c0_i32_0 = arith.constant 0 : i32
    %c0_i32_1 = arith.constant 0 : i32
    return %c0_i32, %c0_i32_0 : i32, i32
  }
  func.func @transform_3(%arg0: i32, %arg1: i32) -> (i32, i32) {
    %c0_i32 = arith.constant 0 : i32
    %c0_i32_0 = arith.constant 0 : i32
    %c0_i32_1 = arith.constant 0 : i32
    return %c0_i32, %c0_i32_0 : i32, i32
  }
  func.func @transform_4(%arg0: i32, %arg1: i32) -> (i32, i32) {
    %c0_i32 = arith.constant 0 : i32
    %c0_i32_0 = arith.constant 0 : i32
    %c0_i32_1 = arith.constant 0 : i32
    return %c0_i32, %c0_i32_0 : i32, i32
  }
  func.func @transform_5(%arg0: i32, %arg1: i32) -> (i32, i32, i32) {
    %c0_i32 = arith.constant 0 : i32
    %c0_i32_0 = arith.constant 0 : i32
    %c0_i32_1 = arith.constant 0 : i32
    %c0_i32_2 = arith.constant 0 : i32
    return %c0_i32, %c0_i32_0, %c0_i32_1 : i32, i32, i32
  }
  func.func @transform_6(%arg0: i32, %arg1: i32) -> (i32, i32) {
    %c0_i32 = arith.constant 0 : i32
    %c0_i32_0 = arith.constant 0 : i32
    %c0_i32_1 = arith.constant 0 : i32
    return %c0_i32, %c0_i32_0 : i32, i32
  }
  func.func @transform_7(%arg0: i32, %arg1: i32) -> (i32, i32) {
    %c0_i32 = arith.constant 0 : i32
    %c0_i32_0 = arith.constant 0 : i32
    %c0_i32_1 = arith.constant 0 : i32
    return %c0_i32, %c0_i32_0 : i32, i32
  }
  func.func @transform_8(%arg0: i32, %arg1: i32) -> (i32, i32) {
    %c0_i32 = arith.constant 0 : i32
    %c0_i32_0 = arith.constant 0 : i32
    %c0_i32_1 = arith.constant 0 : i32
    return %c0_i32, %c0_i32_0 : i32, i32
  }
  func.func @transform_9(%arg0: i32, %arg1: i32) -> (i32, i32) {
    %c0_i32 = arith.constant 0 : i32
    %c0_i32_0 = arith.constant 0 : i32
    %c0_i32_1 = arith.constant 0 : i32
    return %c0_i32, %c0_i32_0 : i32, i32
  }
  func.func @transform_10(%arg0: i32, %arg1: i32) -> (i32, i32) {
    %c0_i32 = arith.constant 0 : i32
    %c0_i32_0 = arith.constant 0 : i32
    %c0_i32_1 = arith.constant 0 : i32
    return %c0_i32, %c0_i32_0 : i32, i32
  }
  func.func @transform_11(%arg0: i32, %arg1: i32) -> (i32, i32) {
    %c0_i32 = arith.constant 0 : i32
    %c0_i32_0 = arith.constant 0 : i32
    %c0_i32_1 = arith.constant 0 : i32
    return %c0_i32, %c0_i32_0 : i32, i32
  }
  func.func @transform_12(%arg0: i32, %arg1: i32) -> (i32, i32) {
    %c0_i32 = arith.constant 0 : i32
    %c0_i32_0 = arith.constant 0 : i32
    %c0_i32_1 = arith.constant 0 : i32
    return %c0_i32, %c0_i32_0 : i32, i32
  }
  func.func @transform_13(%arg0: i32, %arg1: i32) -> (i32, i32, i32) {
    %c0_i32 = arith.constant 0 : i32
    %c0_i32_0 = arith.constant 0 : i32
    return %arg0, %arg1, %c0_i32 : i32, i32, i32
  }
}

</mosaic_0001>

<llo_original>
// kernel: tpu_custom_call.1
$region0: #{tpu_custom_call.1}
  #allocation0 [shape = 'u32[]', space=smem, size = 0x4, offset = 0x4, fixed_abs, tag = 'smem constant byte address 0x4 - core index']
  #allocation1 [shape = 'u32[144,128]{1,0:T(1,128)}', space=vmem, size = 0x12000, scoped, tag = 'internal scratch']
  #allocation2 [shape = 'bf16[4,8,8]{2,1,0:T(8,128)(2,1)}', space=vmem, size = 0x2000, scoped, tag = 'scratch operand']
  #allocation3 [shape = 'bf16[4,8,8]{2,1,0:T(8,128)(2,1)}', space=vmem, size = 0x2000, scoped, tag = 'scratch operand']
  #allocation4 [shape = 'bf16[4,8,8]{2,1,0:T(8,128)(2,1)}', space=vmem, size = 0x2000, scoped, tag = 'scratch operand']
  %s0 = inlined_call_operand.vmem [shape: f32[2,8,32], index: 0, kind: input, shape index: {}]
  %s1 = inlined_call_operand.vmem [shape: f32[1,32], index: 1, kind: input, shape index: {}]
  %s2 = inlined_call_operand.vmem [shape: f32[1,32], index: 2, kind: input, shape index: {}]
  %s3 = inlined_call_operand.vmem [shape: bf16[32,96], index: 3, kind: input, shape index: {}]
  %s4 = inlined_call_operand.vmem [shape: f32[1,96], index: 4, kind: input, shape index: {}]
  %s5 = inlined_call_operand.vmem [shape: bf16[4,8,32], index: 5, kind: input, shape index: {}]
  %s6 = inlined_call_operand.vmem [shape: f32[1,32], index: 6, kind: input, shape index: {}]
  %s7 = inlined_call_operand.vmem [shape: f32[1,32], index: 7, kind: input, shape index: {}]
  %s8 = inlined_call_operand.vmem [shape: f32[1,32], index: 8, kind: input, shape index: {}]
  %s9 = inlined_call_operand.vmem [shape: bf16[32,128], index: 9, kind: input, shape index: {}]
  %s10 = inlined_call_operand.vmem [shape: f32[1,128], index: 10, kind: input, shape index: {}]
  %s11 = inlined_call_operand.vmem [shape: bf16[128,32], index: 11, kind: input, shape index: {}]
  %s12 = inlined_call_operand.vmem [shape: f32[1,32], index: 12, kind: input, shape index: {}]
  %s13 = inlined_call_operand.hbm [shape: f32[2,8,32], index: 13, kind: output, shape index: {}]
  %s14 = sld [smem:[#allocation0]]
  $region89: #{tpu_custom_call.1} parent=0
    _
  %s16 = ssub.s32 1, %s14
  %s17 = scalar_select 0, %s16, %s14
  $region1: #{tpu_custom_call.1} parent=0
    #allocation5 [shape = 'u8[8192]{0}', space=vmem, size = 0x2000, scoped, tag = 'output window, operand 0']
    #allocation6 [shape = 's32[2]{0}', space=sflag, size = 0x8, scoped, tag = 'scoped memory for tpu_custom_call.1']
    %18 = vsyncpa [#allocation6], 0
    %s19 = scalar_lea.sflag [#allocation6], 1
    %20 = vsyncpa %s19, 0
    loop: start=0, step=1, limit=4
    $region2: #{tpu_custom_call.1} parent=1 // loop_pre_header
      _
    $region3: #{tpu_custom_call.1} parent=1 // loop_header
      %s22 = sphi 0, %s26
      %p23 = scmp.ge.s32.totalorder %s22, 4
      %s29 = sphi 0, %s41
      %s30 = sphi 0, %s37
      %s31 = sphi 0, %s29
      %s32 = sphi 0, %s30
      %s33 = sphi 0, %s31
      %s34 = sphi 0, %s32
      %s44 = sphi 0, %s46
      %s47 = sphi 0, %s44
      %s48 = sphi 0, %s47
      %s64 = sphi 0, %s48
      %s68 = sphi 0, %s68
      %s70 = sphi 0, %s68
      %s71 = sphi 0, %s70
      %s85 = sphi 0, %s71
      %s89 = sphi 0, %s89
      %s91 = sphi 0, %s89
      %s92 = sphi 0, %s91
      %s106 = sphi 0, %s92
      %s110 = sphi 0, %s110
      %s112 = sphi 0, %s110
      %s113 = sphi 0, %s112
      %s127 = sphi 0, %s113
      %s131 = sphi 0, %s131
      %s133 = sphi 0, %s131
      %s134 = sphi 0, %s133
      %s148 = sphi 0, %s134
      %s152 = sphi 0, %s152
      %s154 = sphi 0, %s152
      %s155 = sphi 0, %s154
      %s169 = sphi 0, %s155
      %s173 = sphi 0, %s173
      %s175 = sphi 0, %s173
      %s176 = sphi 0, %s175
      %s190 = sphi 0, %s176
      %s194 = sphi 0, %s194
      %s196 = sphi 0, %s194
      %s197 = sphi 0, %s196
      %s211 = sphi 0, %s197
      %s215 = sphi 0, %s215
      %s217 = sphi 0, %s215
      %s218 = sphi 0, %s217
      %s232 = sphi 0, %s218
      %s236 = sphi 0, %s236
      %s238 = sphi 0, %s236
      %s239 = sphi 0, %s238
      %s253 = sphi 0, %s239
      %s257 = sphi 0, %s257
      %s259 = sphi 0, %s257
      %s260 = sphi 0, %s259
      %s274 = sphi 0, %s260
      %s278 = sphi 0, %s278
      %s280 = sphi 0, %s278
      %s281 = sphi 0, %s280
      %s295 = sphi 0, %s281
      %s299 = sphi 0, %s299
      %s301 = sphi 0, %s299
      %s302 = sphi 0, %s301
      %s316 = sphi 0, %s302
      %s324 = sphi 0, %s326
      %s327 = sphi 0, %s324
      %s328 = sphi 0, %s327
      %s344 = sphi 0, %s328
    $region4: #{tpu_custom_call.1} parent=1 // loop_header_branch
      %25 = sbr.rel (%p23) target = $region8
    $region5: #{tpu_custom_call.1} parent=1 // loop_body
      %s27 = ssub.s32 %s22, 1
      %s28 = ssub.s32 %s22, 2
      %s35 = sadd.s32 1, %s30
      %p36 = scmp.ge.s32.totalorder %s35, 1
      %s37 = scalar_select %p36, 0, %s35
      %s38 = sadd.s32 1, %s29
      %s39 = scalar_select %p36, %s38, %s29
      %p40 = scmp.ge.s32.totalorder %s39, 2
      %s41 = scalar_select %p40, 0, %s39
      %s42 = ssub.s32 %s29, %s41
      %p43 = scmp.eq.s32.totalorder %s42, 0
      %s45 = sadd.s32 %s44, 1
      %s46 = scalar_select %p43, %s44, %s45
      %p49 = pneg %p43
      %p50 = scmp.eq.s32.totalorder %s22, 1
      %p51 = por %p49, %p50
      %p52 = scmp.ne.s32.totalorder %s44, %s47
      %p53 = scmp.eq.s32.totalorder %s22, 0
      %p54 = por %p52, %p53
      %p55 = scmp.ne.s32.totalorder %s44, %s47
      %p56 = scmp.eq.s32.totalorder %s27, 1
      %p57 = por %p55, %p56
      %p58 = scmp.ne.s32.totalorder %s47, %s48
      %p59 = scmp.eq.s32.totalorder %s27, 0
      %p60 = por %p58, %p59
      %p61 = scmp.ne.s32.totalorder %s47, %s48
      %p62 = scmp.eq.s32.totalorder %s28, 1
      %p63 = por %p61, %p62
      %p65 = scmp.ne.s32.totalorder %s48, %s64
      %p66 = scmp.eq.s32.totalorder %s28, 0
      %p67 = por %p65, %p66
      %s69 = sadd.s32 %s68, 1
      %p72 = scmp.eq.s32.totalorder %s22, 1
      %p73 = scmp.ne.s32.totalorder %s68, %s70
      %p74 = scmp.eq.s32.totalorder %s22, 0
      %p75 = por %p73, %p74
      %p76 = scmp.ne.s32.totalorder %s68, %s70
      %p77 = scmp.eq.s32.totalorder %s27, 1
      %p78 = por %p76, %p77
      %p79 = scmp.ne.s32.totalorder %s70, %s71
      %p80 = scmp.eq.s32.totalorder %s27, 0
      %p81 = por %p79, %p80
      %p82 = scmp.ne.s32.totalorder %s70, %s71
      %p83 = scmp.eq.s32.totalorder %s28, 1
      %p84 = por %p82, %p83
      %p86 = scmp.ne.s32.totalorder %s71, %s85
      %p87 = scmp.eq.s32.totalorder %s28, 0
      %p88 = por %p86, %p87
      %s90 = sadd.s32 %s89, 1
      %p93 = scmp.eq.s32.totalorder %s22, 1
      %p94 = scmp.ne.s32.totalorder %s89, %s91
      %p95 = scmp.eq.s32.totalorder %s22, 0
      %p96 = por %p94, %p95
      %p97 = scmp.ne.s32.totalorder %s89, %s91
      %p98 = scmp.eq.s32.totalorder %s27, 1
      %p99 = por %p97, %p98
      %p100 = scmp.ne.s32.totalorder %s91, %s92
      %p101 = scmp.eq.s32.totalorder %s27, 0
      %p102 = por %p100, %p101
      %p103 = scmp.ne.s32.totalorder %s91, %s92
      %p104 = scmp.eq.s32.totalorder %s28, 1
      %p105 = por %p103, %p104
      %p107 = scmp.ne.s32.totalorder %s92, %s106
      %p108 = scmp.eq.s32.totalorder %s28, 0
      %p109 = por %p107, %p108
      %s111 = sadd.s32 %s110, 1
      %p114 = scmp.eq.s32.totalorder %s22, 1
      %p115 = scmp.ne.s32.totalorder %s110, %s112
      %p116 = scmp.eq.s32.totalorder %s22, 0
      %p117 = por %p115, %p116
      %p118 = scmp.ne.s32.totalorder %s110, %s112
      %p119 = scmp.eq.s32.totalorder %s27, 1
      %p120 = por %p118, %p119
      %p121 = scmp.ne.s32.totalorder %s112, %s113
      %p122 = scmp.eq.s32.totalorder %s27, 0
      %p123 = por %p121, %p122
      %p124 = scmp.ne.s32.totalorder %s112, %s113
      %p125 = scmp.eq.s32.totalorder %s28, 1
      %p126 = por %p124, %p125
      %p128 = scmp.ne.s32.totalorder %s113, %s127
      %p129 = scmp.eq.s32.totalorder %s28, 0
      %p130 = por %p128, %p129
      %s132 = sadd.s32 %s131, 1
      %p135 = scmp.eq.s32.totalorder %s22, 1
      %p136 = scmp.ne.s32.totalorder %s131, %s133
      %p137 = scmp.eq.s32.totalorder %s22, 0
      %p138 = por %p136, %p137
      %p139 = scmp.ne.s32.totalorder %s131, %s133
      %p140 = scmp.eq.s32.totalorder %s27, 1
      %p141 = por %p139, %p140
      %p142 = scmp.ne.s32.totalorder %s133, %s134
      %p143 = scmp.eq.s32.totalorder %s27, 0
      %p144 = por %p142, %p143
      %p145 = scmp.ne.s32.totalorder %s133, %s134
      %p146 = scmp.eq.s32.totalorder %s28, 1
      %p147 = por %p145, %p146
      %p149 = scmp.ne.s32.totalorder %s134, %s148
      %p150 = scmp.eq.s32.totalorder %s28, 0
      %p151 = por %p149, %p150
      %s153 = sadd.s32 %s152, 1
      %p156 = scmp.eq.s32.totalorder %s22, 1
      %p157 = scmp.ne.s32.totalorder %s152, %s154
      %p158 = scmp.eq.s32.totalorder %s22, 0
      %p159 = por %p157, %p158
      %p160 = scmp.ne.s32.totalorder %s152, %s154
      %p161 = scmp.eq.s32.totalorder %s27, 1
      %p162 = por %p160, %p161
      %p163 = scmp.ne.s32.totalorder %s154, %s155
      %p164 = scmp.eq.s32.totalorder %s27, 0
      %p165 = por %p163, %p164
      %p166 = scmp.ne.s32.totalorder %s154, %s155
      %p167 = scmp.eq.s32.totalorder %s28, 1
      %p168 = por %p166, %p167
      %p170 = scmp.ne.s32.totalorder %s155, %s169
      %p171 = scmp.eq.s32.totalorder %s28, 0
      %p172 = por %p170, %p171
      %s174 = sadd.s32 %s173, 1
      %p177 = scmp.eq.s32.totalorder %s22, 1
      %p178 = scmp.ne.s32.totalorder %s173, %s175
      %p179 = scmp.eq.s32.totalorder %s22, 0
      %p180 = por %p178, %p179
      %p181 = scmp.ne.s32.totalorder %s173, %s175
      %p182 = scmp.eq.s32.totalorder %s27, 1
      %p183 = por %p181, %p182
      %p184 = scmp.ne.s32.totalorder %s175, %s176
      %p185 = scmp.eq.s32.totalorder %s27, 0
      %p186 = por %p184, %p185
      %p187 = scmp.ne.s32.totalorder %s175, %s176
      %p188 = scmp.eq.s32.totalorder %s28, 1
      %p189 = por %p187, %p188
      %p191 = scmp.ne.s32.totalorder %s176, %s190
      %p192 = scmp.eq.s32.totalorder %s28, 0
      %p193 = por %p191, %p192
      %s195 = sadd.s32 %s194, 1
      %p198 = scmp.eq.s32.totalorder %s22, 1
      %p199 = scmp.ne.s32.totalorder %s194, %s196
      %p200 = scmp.eq.s32.totalorder %s22, 0
      %p201 = por %p199, %p200
      %p202 = scmp.ne.s32.totalorder %s194, %s196
      %p203 = scmp.eq.s32.totalorder %s27, 1
      %p204 = por %p202, %p203
      %p205 = scmp.ne.s32.totalorder %s196, %s197
      %p206 = scmp.eq.s32.totalorder %s27, 0
      %p207 = por %p205, %p206
      %p208 = scmp.ne.s32.totalorder %s196, %s197
      %p209 = scmp.eq.s32.totalorder %s28, 1
      %p210 = por %p208, %p209
      %p212 = scmp.ne.s32.totalorder %s197, %s211
      %p213 = scmp.eq.s32.totalorder %s28, 0
      %p214 = por %p212, %p213
      %s216 = sadd.s32 %s215, 1
      %p219 = scmp.eq.s32.totalorder %s22, 1
      %p220 = scmp.ne.s32.totalorder %s215, %s217
      %p221 = scmp.eq.s32.totalorder %s22, 0
      %p222 = por %p220, %p221
      %p223 = scmp.ne.s32.totalorder %s215, %s217
      %p224 = scmp.eq.s32.totalorder %s27, 1
      %p225 = por %p223, %p224
      %p226 = scmp.ne.s32.totalorder %s217, %s218
      %p227 = scmp.eq.s32.totalorder %s27, 0
      %p228 = por %p226, %p227
      %p229 = scmp.ne.s32.totalorder %s217, %s218
      %p230 = scmp.eq.s32.totalorder %s28, 1
      %p231 = por %p229, %p230
      %p233 = scmp.ne.s32.totalorder %s218, %s232
      %p234 = scmp.eq.s32.totalorder %s28, 0
      %p235 = por %p233, %p234
      %s237 = sadd.s32 %s236, 1
      %p240 = scmp.eq.s32.totalorder %s22, 1
      %p241 = scmp.ne.s32.totalorder %s236, %s238
      %p242 = scmp.eq.s32.totalorder %s22, 0
      %p243 = por %p241, %p242
      %p244 = scmp.ne.s32.totalorder %s236, %s238
      %p245 = scmp.eq.s32.totalorder %s27, 1
      %p246 = por %p244, %p245
      %p247 = scmp.ne.s32.totalorder %s238, %s239
      %p248 = scmp.eq.s32.totalorder %s27, 0
      %p249 = por %p247, %p248
      %p250 = scmp.ne.s32.totalorder %s238, %s239
      %p251 = scmp.eq.s32.totalorder %s28, 1
      %p252 = por %p250, %p251
      %p254 = scmp.ne.s32.totalorder %s239, %s253
      %p255 = scmp.eq.s32.totalorder %s28, 0
      %p256 = por %p254, %p255
      %s258 = sadd.s32 %s257, 1
      %p261 = scmp.eq.s32.totalorder %s22, 1
      %p262 = scmp.ne.s32.totalorder %s257, %s259
      %p263 = scmp.eq.s32.totalorder %s22, 0
      %p264 = por %p262, %p263
      %p265 = scmp.ne.s32.totalorder %s257, %s259
      %p266 = scmp.eq.s32.totalorder %s27, 1
      %p267 = por %p265, %p266
      %p268 = scmp.ne.s32.totalorder %s259, %s260
      %p269 = scmp.eq.s32.totalorder %s27, 0
      %p270 = por %p268, %p269
      %p271 = scmp.ne.s32.totalorder %s259, %s260
      %p272 = scmp.eq.s32.totalorder %s28, 1
      %p273 = por %p271, %p272
      %p275 = scmp.ne.s32.totalorder %s260, %s274
      %p276 = scmp.eq.s32.totalorder %s28, 0
      %p277 = por %p275, %p276
      %s279 = sadd.s32 %s278, 1
      %p282 = scmp.eq.s32.totalorder %s22, 1
      %p283 = scmp.ne.s32.totalorder %s278, %s280
      %p284 = scmp.eq.s32.totalorder %s22, 0
      %p285 = por %p283, %p284
      %p286 = scmp.ne.s32.totalorder %s278, %s280
      %p287 = scmp.eq.s32.totalorder %s27, 1
      %p288 = por %p286, %p287
      %p289 = scmp.ne.s32.totalorder %s280, %s281
      %p290 = scmp.eq.s32.totalorder %s27, 0
      %p291 = por %p289, %p290
      %p292 = scmp.ne.s32.totalorder %s280, %s281
      %p293 = scmp.eq.s32.totalorder %s28, 1
      %p294 = por %p292, %p293
      %p296 = scmp.ne.s32.totalorder %s281, %s295
      %p297 = scmp.eq.s32.totalorder %s28, 0
      %p298 = por %p296, %p297
      %s300 = sadd.s32 %s299, 1
      %p303 = scmp.eq.s32.totalorder %s22, 1
      %p304 = scmp.ne.s32.totalorder %s299, %s301
      %p305 = scmp.eq.s32.totalorder %s22, 0
      %p306 = por %p304, %p305
      %p307 = scmp.ne.s32.totalorder %s299, %s301
      %p308 = scmp.eq.s32.totalorder %s27, 1
      %p309 = por %p307, %p308
      %p310 = scmp.ne.s32.totalorder %s301, %s302
      %p311 = scmp.eq.s32.totalorder %s27, 0
      %p312 = por %p310, %p311
      %p313 = scmp.ne.s32.totalorder %s301, %s302
      %p314 = scmp.eq.s32.totalorder %s28, 1
      %p315 = por %p313, %p314
      %p317 = scmp.ne.s32.totalorder %s302, %s316
      %p318 = scmp.eq.s32.totalorder %s28, 0
      %p319 = por %p317, %p318
      %s320 = ssub.s32 %s29, %s41
      %s321 = ssub.s32 %s30, %s37
      %s322 = sor.u32 %s320, %s321
      %p323 = scmp.eq.s32.totalorder %s322, 0
      %s325 = sadd.s32 %s324, 1
      %s326 = scalar_select %p323, %s324, %s325
      %p329 = pneg %p323
      %p330 = scmp.eq.s32.totalorder %s22, 1
      %p331 = por %p329, %p330
      %p332 = scmp.ne.s32.totalorder %s324, %s327
      %p333 = scmp.eq.s32.totalorder %s22, 0
      %p334 = por %p332, %p333
      %p335 = scmp.ne.s32.totalorder %s324, %s327
      %p336 = scmp.eq.s32.totalorder %s27, 1
      %p337 = por %p335, %p336
      %p338 = scmp.ne.s32.totalorder %s327, %s328
      %p339 = scmp.eq.s32.totalorder %s27, 0
      %p340 = por %p338, %p339
      %p341 = scmp.ne.s32.totalorder %s327, %s328
      %p342 = scmp.eq.s32.totalorder %s28, 1
      %p343 = por %p341, %p342
      %p345 = scmp.ne.s32.totalorder %s328, %s344
      %p346 = scmp.eq.s32.totalorder %s28, 0
      %p347 = por %p345, %p346
      %p348 = scmp.le.s32.totalorder 1, %s22
      %p349 = scmp.lt.s32.totalorder %s22, 3
      %p350 = pnand %p348, %p349
      %p351 = pneg %p350
      // Predicated region
      $region9: #{tpu_custom_call.1} parent=5 // pred_check
        _
      $region10: #{tpu_custom_call.1} parent=5 // pred_check_branch
        %353 = sbr.rel (%p350) target = $region12
      $region11: #{tpu_custom_call.1} parent=5 // pred_region
        %s354 = ssub.s32 %s22, 1
        // Predicated region
        $region13: #{tpu_custom_call.1} parent=11 // pred_check
          %p355 = pneg %p81
        $region14: #{tpu_custom_call.1} parent=11 // pred_check_branch
          %357 = sbr.rel (%p355) target = $region16
        $region15: #{tpu_custom_call.1} parent=11 // pred_region
          _
        $region16: #{tpu_custom_call.1} parent=11 // pred_fallthru
          _
        // Predicated region
        $region17: #{tpu_custom_call.1} parent=11 // pred_check
          %p358 = pneg %p102
        $region18: #{tpu_custom_call.1} parent=11 // pred_check_branch
          %360 = sbr.rel (%p358) target = $region20
        $region19: #{tpu_custom_call.1} parent=11 // pred_region
          _
        $region20: #{tpu_custom_call.1} parent=11 // pred_fallthru
          _
        // Predicated region
        $region21: #{tpu_custom_call.1} parent=11 // pred_check
          %p361 = pneg %p123
        $region22: #{tpu_custom_call.1} parent=11 // pred_check_branch
          %363 = sbr.rel (%p361) target = $region24
        $region23: #{tpu_custom_call.1} parent=11 // pred_region
          _
        $region24: #{tpu_custom_call.1} parent=11 // pred_fallthru
          _
        // Predicated region
        $region25: #{tpu_custom_call.1} parent=11 // pred_check
          %p364 = pneg %p144
        $region26: #{tpu_custom_call.1} parent=11 // pred_check_branch
          %366 = sbr.rel (%p364) target = $region28
        $region27: #{tpu_custom_call.1} parent=11 // pred_region
          _
        $region28: #{tpu_custom_call.1} parent=11 // pred_fallthru
          _
        // Predicated region
        $region29: #{tpu_custom_call.1} parent=11 // pred_check
          %p367 = pneg %p165
        $region30: #{tpu_custom_call.1} parent=11 // pred_check_branch
          %369 = sbr.rel (%p367) target = $region32
        $region31: #{tpu_custom_call.1} parent=11 // pred_region
          _
        $region32: #{tpu_custom_call.1} parent=11 // pred_fallthru
          _
        // Predicated region
        $region33: #{tpu_custom_call.1} parent=11 // pred_check
          %p370 = pneg %p186
        $region34: #{tpu_custom_call.1} parent=11 // pred_check_branch
          %372 = sbr.rel (%p370) target = $region36
        $region35: #{tpu_custom_call.1} parent=11 // pred_region
          _
        $region36: #{tpu_custom_call.1} parent=11 // pred_fallthru
          _
        // Predicated region
        $region37: #{tpu_custom_call.1} parent=11 // pred_check
          %p373 = pneg %p207
        $region38: #{tpu_custom_call.1} parent=11 // pred_check_branch
          %375 = sbr.rel (%p373) target = $region40
        $region39: #{tpu_custom_call.1} parent=11 // pred_region
          _
        $region40: #{tpu_custom_call.1} parent=11 // pred_fallthru
          _
        // Predicated region
        $region41: #{tpu_custom_call.1} parent=11 // pred_check
          %p376 = pneg %p228
        $region42: #{tpu_custom_call.1} parent=11 // pred_check_branch
          %378 = sbr.rel (%p376) target = $region44
        $region43: #{tpu_custom_call.1} parent=11 // pred_region
          _
        $region44: #{tpu_custom_call.1} parent=11 // pred_fallthru
          _
        // Predicated region
        $region45: #{tpu_custom_call.1} parent=11 // pred_check
          %p379 = pneg %p249
        $region46: #{tpu_custom_call.1} parent=11 // pred_check_branch
          %381 = sbr.rel (%p379) target = $region48
        $region47: #{tpu_custom_call.1} parent=11 // pred_region
          _
        $region48: #{tpu_custom_call.1} parent=11 // pred_fallthru
          _
        // Predicated region
        $region49: #{tpu_custom_call.1} parent=11 // pred_check
          %p382 = pneg %p270
        $region50: #{tpu_custom_call.1} parent=11 // pred_check_branch
          %384 = sbr.rel (%p382) target = $region52
        $region51: #{tpu_custom_call.1} parent=11 // pred_region
          _
        $region52: #{tpu_custom_call.1} parent=11 // pred_fallthru
          _
        // Predicated region
        $region53: #{tpu_custom_call.1} parent=11 // pred_check
          %p385 = pneg %p291
        $region54: #{tpu_custom_call.1} parent=11 // pred_check_branch
          %387 = sbr.rel (%p385) target = $region56
        $region55: #{tpu_custom_call.1} parent=11 // pred_region
          _
        $region56: #{tpu_custom_call.1} parent=11 // pred_fallthru
          _
        // Predicated region
        $region57: #{tpu_custom_call.1} parent=11 // pred_check
          %p388 = pneg %p312
        $region58: #{tpu_custom_call.1} parent=11 // pred_check_branch
          %390 = sbr.rel (%p388) target = $region60
        $region59: #{tpu_custom_call.1} parent=11 // pred_region
          _
        $region60: #{tpu_custom_call.1} parent=11 // pred_fallthru
          _
      $region12: #{tpu_custom_call.1} parent=5 // pred_fallthru
        _
      %p391 = scmp.lt.s32.totalorder %s22, 2
      // Predicated region
      $region61: #{tpu_custom_call.1} parent=5 // pred_check
        %p392 = pneg %p391
      $region62: #{tpu_custom_call.1} parent=5 // pred_check_branch
        %394 = sbr.rel (%p392) target = $region64
      $region63: #{tpu_custom_call.1} parent=5 // pred_region
        // Predicated region
        $region65: #{tpu_custom_call.1} parent=63 // pred_check
          %p395 = pneg %p54
        $region66: #{tpu_custom_call.1} parent=63 // pred_check_branch
          %397 = sbr.rel (%p395) target = $region68
        $region67: #{tpu_custom_call.1} parent=63 // pred_region
          %p398 = scmp.lt.s32.totalorder %s29, 1
          %s399 = scalar_select %p398, %s29, 1
          %s400 = smul.addr %s399, 8
          %s401 = scalar_lea.vmem %s0, %s400
        $region68: #{tpu_custom_call.1} parent=63 // pred_fallthru
          _
      $region64: #{tpu_custom_call.1} parent=5 // pred_fallthru
        _
      %p402 = scmp.le.s32.totalorder 1, %s22
      %p403 = scmp.lt.s32.totalorder %s22, 3
      %p404 = pnand %p402, %p403
      %p405 = pneg %p404
      // Predicated region
      $region69: #{tpu_custom_call.1} parent=5 // pred_check
        _
      $region70: #{tpu_custom_call.1} parent=5 // pred_check_branch
        %407 = sbr.rel (%p404) target = $region72
      $region71: #{tpu_custom_call.1} parent=5 // pred_region
        %s408 = ssub.s32 %s22, 1
        %p409 = scmp.lt.s32.totalorder %s31, 1
        %s410 = scalar_select %p409, %s31, 1
        %s411 = smul.addr %s410, 8
        %s412 = scalar_lea.vmem %s0, %s411
        %p413 = pneg %p60
        %p414 = pneg %p57
        %p415 = pneg %p81
        %p416 = pneg %p78
        %p417 = pneg %p102
        %p418 = pneg %p99
        %p419 = pneg %p123
        %p420 = pneg %p120
        %p421 = pneg %p144
        %p422 = pneg %p141
        %p423 = pneg %p165
        %p424 = pneg %p162
        %p425 = pneg %p186
        %p426 = pneg %p183
        %p427 = pneg %p207
        %p428 = pneg %p204
        %p429 = pneg %p228
        %p430 = pneg %p225
        %p431 = pneg %p249
        %p432 = pneg %p246
        %p433 = pneg %p270
        %p434 = pneg %p267
        %p435 = pneg %p291
        %p436 = pneg %p288
        %p437 = pneg %p312
        %p438 = pneg %p309
        %p439 = pneg %p340
        %p440 = pneg %p337
        %s441 = sand.u32 %s327, 1
        %s442 = scalar_lea.sflag [#allocation6], %s441
        %s443 = sand.u32 %s327, 1
        %s444 = smul.addr %s443, 8
        %s445 = scalar_lea.vmem [#allocation5], %s444
        %p446 = scmp.lt.s32.totalorder %s31, 1
        %s447 = scalar_select %p446, %s31, 1
        %s448 = smul.addr %s447, 8
        %s449 = scalar_lea.vmem %s0, %s448
        %p451 = scmp.eq.s32.totalorder %s32, 0
        // Predicated region
        $region73: #{tpu_custom_call.1} parent=71 // pred_check
          %p452 = pneg %p451
        $region74: #{tpu_custom_call.1} parent=71 // pred_check_branch
          %454 = sbr.rel (%p452) target = $region76
        $region75: #{tpu_custom_call.1} parent=71 // pred_region
          %v455 = vld [vmem:[%s449] sm:$0xff]
          %v456 = vld [vmem:[%s1] sm:$0x1]
          %v457 = vld [vmem:[%s2] sm:$0x1]
          %vm458 = vcmask 261120
          %v459 = vsel %vm458, %v455, 0.0
          %460 = vadd.xlane.f32.xlu0 %v459
          %v461 = vpop.xlane.xlu0 %460
          %v462 = vrcp.pop 32.0
          %v463 = vmul.f32 %v461, %v462
          %v464 = vsub.f32 %v455, %v463
          %v465 = vmul.f32 %v464, %v464
          %v466 = vsel %vm458, %v465, 0.0
          %467 = vadd.xlane.f32.xlu0 %v466
          %v468 = vpop.xlane.xlu0 %467
          %v469 = vmul.f32 %v468, %v462
          %v470 = vadd.f32 %v469, 1e-05
          %v471 = vrsqrt.pop %v470
          %v472 = vmul.f32 %v464, %v471
          %v474 = vlaneseq
          %v475 = vshrl.u32 %v474, 7
          %v476 = vsub.s32 0, %v475
          %v477 = vrot.slane %v456, %v476
          %v479 = vmul.f32 %v472, %v477
          %v481 = vlaneseq
          %v482 = vshrl.u32 %v481, 7
          %v483 = vsub.s32 0, %v482
          %v484 = vrot.slane %v457, %v483
          %v486 = vadd.f32 %v479, %v484
          %v487 = vpack.c.bf16 %v486, %v486
          %v488 = vld [vmem:[%s3] sm:$0xf]
          %v489 = vld [vmem:[%s3 + $0x4] sm:$0xf]
          %v490 = vld [vmem:[%s3 + $0x8] sm:$0xf]
          %v491 = vld [vmem:[%s3 + $0xc] sm:$0xf]
          %v492 = vld [vmem:[%s4] sm:$0x1]
          %v494 = vlaneseq
          %v495 = vshrl.u32 %v494, 7
          %v496 = vsub.s32 0, %v495
          %v497 = vrot.slane %v492, %v496
          %v503 = vunpack.c.l.b16 %v488
          %v504 = vunpack.c.l.b16 %v489
          %v505 = vunpack.c.l.b16 %v490
          %v506 = vunpack.c.l.b16 %v491
          %v507 = vpack.c.b16 %v504, %v503
          %v508 = vpack.c.b16 %v506, %v505
          %v512 = vsel %vm458, %v487, 0
          %514 = vmatprep.subr.bf16.mxu0 0
          %515 = vmatpush1.bf16.msra.mxu0 %v507
          %516 = vmatprep.subr.bf16.mxu0 0
          %517 = vmatpush1.bf16.msra.mxu0 %v508
          %518 = vmatprep.subr.bf16.mxu0 0
          %519 = vmatpush1.bf16.msra.mxu0 0
          %520 = vmatprep.subr.bf16.mxu0 0
          %521 = vmatpush1.bf16.msra.mxu0 0
          %522 = vmatprep.subr.bf16.mxu0 0
          %523 = vmatpush1.bf16.msra.mxu0 0
          %524 = vmatprep.subr.bf16.mxu0 0
          %525 = vmatpush1.bf16.msra.mxu0 0
          %526 = vmatprep.subr.bf16.mxu0 0
          %527 = vmatpush1.bf16.msra.mxu0 0
          %528 = vmatprep.subr.bf16.mxu0 0
          %529 = vmatpush1.bf16.msra.mxu0 0
          %530 = vmatprep.subr.bf16.mxu0 0
          %531 = vmatpush1.bf16.msra.mxu0 0
          %532 = vmatprep.subr.bf16.mxu0 0
          %533 = vmatpush1.bf16.msra.mxu0 0
          %534 = vmatprep.subr.bf16.mxu0 0
          %535 = vmatpush1.bf16.msra.mxu0 0
          %536 = vmatprep.subr.bf16.mxu0 0
          %537 = vmatpush1.bf16.msra.mxu0 0
          %538 = vmatprep.subr.bf16.mxu0 0
          %539 = vmatpush1.bf16.msra.mxu0 0
          %540 = vmatprep.subr.bf16.mxu0 0
          %541 = vmatpush1.bf16.msra.mxu0 0
          %542 = vmatprep.subr.bf16.mxu0 0
          %543 = vmatpush1.bf16.msra.mxu0 0
          %544 = vmatprep.subr.bf16.mxu0 0
          %545 = vmatpush1.bf16.msra.mxu0 0
          %546 = vmatprep.mubr.bf16.mxu0 0
          %547 = vmatmul.mubr.bf16.gmra.mrb[0].mxu0 %v512
          %v548 = vpop.f32.mrb[0].mxu0
          %v549 = vadd.f32 %v497, %v548
          %v550 = vpop.f32.mrb[0].mxu0
          %v551 = vpop.f32.mrb[0].mxu0
          %v552 = vpop.f32.mrb[0].mxu0
          %553 = vdwg.mxu0
          %v554 = vmul.f32 %v549, 0.35355338
          %v555 = vpack.c.bf16 %v554, %v554
          %vm556 = vcmask 60416
          %557 = vst.msk [vmem:[#allocation2] sm:$0xf] %vm556, %v555
          %559 = vrot.lane.b32.xlu0 %v549, 96
          %v560 = vpop.permute.xlu0 %559
          %562 = vxpose.xlu0.b32.start [1/16] %v560, 128
          %563 = vxpose.xlu0.b32.cont [2/16] 0.0, 128
          %564 = vxpose.xlu0.b32.cont [3/16] 0.0, 128
          %565 = vxpose.xlu0.b32.cont [4/16] 0.0, 128
          %566 = vxpose.xlu0.b32.cont [5/16] 0.0, 128
          %567 = vxpose.xlu0.b32.cont [6/16] 0.0, 128
          %568 = vxpose.xlu0.b32.cont [7/16] 0.0, 128
          %569 = vxpose.xlu0.b32.cont [8/16] 0.0, 128
          %570 = vxpose.xlu0.b32.cont [9/16] 0.0, 128
          %571 = vxpose.xlu0.b32.cont [10/16] 0.0, 128
          %572 = vxpose.xlu0.b32.cont [11/16] 0.0, 128
          %573 = vxpose.xlu0.b32.cont [12/16] 0.0, 128
          %574 = vxpose.xlu0.b32.cont [13/16] 0.0, 128
          %575 = vxpose.xlu0.b32.cont [14/16] 0.0, 128
          %576 = vxpose.xlu0.b32.cont [15/16] 0.0, 128
          %577 = vxpose.xlu0.b32.end [16/16] 0.0, 128
          %v578 = vpop.trf.xlu0
          %v579 = vpop.trf.xlu0
          %v580 = vpop.trf.xlu0
          %v581 = vpop.trf.xlu0
          %v582 = vpop.trf.xlu0
          %v583 = vpop.trf.xlu0
          %v584 = vpop.trf.xlu0
          %v585 = vpop.trf.xlu0
          %v586 = vpop.trf.xlu0
          %v587 = vpop.trf.xlu0
          %v588 = vpop.trf.xlu0
          %v589 = vpop.trf.xlu0
          %v590 = vpop.trf.xlu0
          %v591 = vpop.trf.xlu0
          %v592 = vpop.trf.xlu0
          %v593 = vpop.trf.xlu0
          %v594 = vpack.c.bf16 %v578, %v578
          %595 = vst.msk [vmem:[#allocation3] sm:$0xf] %vm556, %v594
          %v596 = vpack.c.bf16 %v549, %v549
          %v598 = vunpack.c.l.b16 %v596
          %v599 = vpack.c.b16 %v598, %v598
          %600 = vrot.lane.b32.xlu0 %v599, 64
          %v601 = vpop.permute.xlu0 %600
          %603 = vst.msk [vmem:[#allocation4] sm:$0xf] %vm556, %v601
          %v605 = vunpack.c.l.b16 %v555
          %v606 = vpack.c.b16 %v605, %v605
          %607 = vrot.lane.b32.xlu0 %v606, 120
          %v608 = vpop.permute.xlu0 %607
          %s610 = scalar_lea.vmem [#allocation2], 4
          %611 = vst.msk [vmem:[%s610] sm:$0xf] %vm556, %v608
          %612 = vrot.lane.b32.xlu0 %v549, 88
          %v613 = vpop.permute.xlu0 %612
          %615 = vxpose.xlu0.b32.start [1/16] %v613, 128
          %616 = vxpose.xlu0.b32.cont [2/16] 0.0, 128
          %617 = vxpose.xlu0.b32.cont [3/16] 0.0, 128
          %618 = vxpose.xlu0.b32.cont [4/16] 0.0, 128
          %619 = vxpose.xlu0.b32.cont [5/16] 0.0, 128
          %620 = vxpose.xlu0.b32.cont [6/16] 0.0, 128
          %621 = vxpose.xlu0.b32.cont [7/16] 0.0, 128
          %622 = vxpose.xlu0.b32.cont [8/16] 0.0, 128
          %623 = vxpose.xlu0.b32.cont [9/16] 0.0, 128
          %624 = vxpose.xlu0.b32.cont [10/16] 0.0, 128
          %625 = vxpose.xlu0.b32.cont [11/16] 0.0, 128
          %626 = vxpose.xlu0.b32.cont [12/16] 0.0, 128
          %627 = vxpose.xlu0.b32.cont [13/16] 0.0, 128
          %628 = vxpose.xlu0.b32.cont [14/16] 0.0, 128
          %629 = vxpose.xlu0.b32.cont [15/16] 0.0, 128
          %630 = vxpose.xlu0.b32.end [16/16] 0.0, 128
          %v631 = vpop.trf.xlu0
          %v632 = vpop.trf.xlu0
          %v633 = vpop.trf.xlu0
          %v634 = vpop.trf.xlu0
          %v635 = vpop.trf.xlu0
          %v636 = vpop.trf.xlu0
          %v637 = vpop.trf.xlu0
          %v638 = vpop.trf.xlu0
          %v639 = vpop.trf.xlu0
          %v640 = vpop.trf.xlu0
          %v641 = vpop.trf.xlu0
          %v642 = vpop.trf.xlu0
          %v643 = vpop.trf.xlu0
          %v644 = vpop.trf.xlu0
          %v645 = vpop.trf.xlu0
          %v646 = vpop.trf.xlu0
          %v647 = vpack.c.bf16 %v631, %v631
          %s648 = scalar_lea.vmem [#allocation3], 4
          %649 = vst.msk [vmem:[%s648] sm:$0xf] %vm556, %v647
          %650 = vrot.lane.b32.xlu0 %v599, 56
          %v651 = vpop.permute.xlu0 %650
          %s653 = scalar_lea.vmem [#allocation4], 4
          %654 = vst.msk [vmem:[%s653] sm:$0xf] %vm556, %v651
          %655 = vrot.lane.b32.xlu0 %v606, 112
          %v656 = vpop.permute.xlu0 %655
          %s658 = scalar_lea.vmem [#allocation2], 8
          %659 = vst.msk [vmem:[%s658] sm:$0xf] %vm556, %v656
          %660 = vrot.lane.b32.xlu0 %v549, 80
          %v661 = vpop.permute.xlu0 %660
          %663 = vxpose.xlu0.b32.start [1/16] %v661, 128
          %664 = vxpose.xlu0.b32.cont [2/16] 0.0, 128
          %665 = vxpose.xlu0.b32.cont [3/16] 0.0, 128
          %666 = vxpose.xlu0.b32.cont [4/16] 0.0, 128
          %667 = vxpose.xlu0.b32.cont [5/16] 0.0, 128
          %668 = vxpose.xlu0.b32.cont [6/16] 0.0, 128
          %669 = vxpose.xlu0.b32.cont [7/16] 0.0, 128
          %670 = vxpose.xlu0.b32.cont [8/16] 0.0, 128
          %671 = vxpose.xlu0.b32.cont [9/16] 0.0, 128
          %672 = vxpose.xlu0.b32.cont [10/16] 0.0, 128
          %673 = vxpose.xlu0.b32.cont [11/16] 0.0, 128
          %674 = vxpose.xlu0.b32.cont [12/16] 0.0, 128
          %675 = vxpose.xlu0.b32.cont [13/16] 0.0, 128
          %676 = vxpose.xlu0.b32.cont [14/16] 0.0, 128
          %677 = vxpose.xlu0.b32.cont [15/16] 0.0, 128
          %678 = vxpose.xlu0.b32.end [16/16] 0.0, 128
          %v679 = vpop.trf.xlu0
          %v680 = vpop.trf.xlu0
          %v681 = vpop.trf.xlu0
          %v682 = vpop.trf.xlu0
          %v683 = vpop.trf.xlu0
          %v684 = vpop.trf.xlu0
          %v685 = vpop.trf.xlu0
          %v686 = vpop.trf.xlu0
          %v687 = vpop.trf.xlu0
          %v688 = vpop.trf.xlu0
          %v689 = vpop.trf.xlu0
          %v690 = vpop.trf.xlu0
          %v691 = vpop.trf.xlu0
          %v692 = vpop.trf.xlu0
          %v693 = vpop.trf.xlu0
          %v694 = vpop.trf.xlu0
          %v695 = vpack.c.bf16 %v679, %v679
          %s696 = scalar_lea.vmem [#allocation3], 8
          %697 = vst.msk [vmem:[%s696] sm:$0xf] %vm556, %v695
          %698 = vrot.lane.b32.xlu0 %v599, 48
          %v699 = vpop.permute.xlu0 %698
          %s701 = scalar_lea.vmem [#allocation4], 8
          %702 = vst.msk [vmem:[%s701] sm:$0xf] %vm556, %v699
          %703 = vrot.lane.b32.xlu0 %v606, 104
          %v704 = vpop.permute.xlu0 %703
          %s706 = scalar_lea.vmem [#allocation2], 12
          %707 = vst.msk [vmem:[%s706] sm:$0xf] %vm556, %v704
          %708 = vrot.lane.b32.xlu0 %v549, 72
          %v709 = vpop.permute.xlu0 %708
          %711 = vxpose.xlu0.b32.start [1/16] %v709, 128
          %712 = vxpose.xlu0.b32.cont [2/16] 0.0, 128
          %713 = vxpose.xlu0.b32.cont [3/16] 0.0, 128
          %714 = vxpose.xlu0.b32.cont [4/16] 0.0, 128
          %715 = vxpose.xlu0.b32.cont [5/16] 0.0, 128
          %716 = vxpose.xlu0.b32.cont [6/16] 0.0, 128
          %717 = vxpose.xlu0.b32.cont [7/16] 0.0, 128
          %718 = vxpose.xlu0.b32.cont [8/16] 0.0, 128
          %719 = vxpose.xlu0.b32.cont [9/16] 0.0, 128
          %720 = vxpose.xlu0.b32.cont [10/16] 0.0, 128
          %721 = vxpose.xlu0.b32.cont [11/16] 0.0, 128
          %722 = vxpose.xlu0.b32.cont [12/16] 0.0, 128
          %723 = vxpose.xlu0.b32.cont [13/16] 0.0, 128
          %724 = vxpose.xlu0.b32.cont [14/16] 0.0, 128
          %725 = vxpose.xlu0.b32.cont [15/16] 0.0, 128
          %726 = vxpose.xlu0.b32.end [16/16] 0.0, 128
          %v727 = vpop.trf.xlu0
          %v728 = vpop.trf.xlu0
          %v729 = vpop.trf.xlu0
          %v730 = vpop.trf.xlu0
          %v731 = vpop.trf.xlu0
          %v732 = vpop.trf.xlu0
          %v733 = vpop.trf.xlu0
          %v734 = vpop.trf.xlu0
          %v735 = vpop.trf.xlu0
          %v736 = vpop.trf.xlu0
          %v737 = vpop.trf.xlu0
          %v738 = vpop.trf.xlu0
          %v739 = vpop.trf.xlu0
          %v740 = vpop.trf.xlu0
          %v741 = vpop.trf.xlu0
          %v742 = vpop.trf.xlu0
          %v743 = vpack.c.bf16 %v727, %v727
          %s744 = scalar_lea.vmem [#allocation3], 12
          %745 = vst.msk [vmem:[%s744] sm:$0xf] %vm556, %v743
          %746 = vrot.lane.b32.xlu0 %v599, 40
          %v747 = vpop.permute.xlu0 %746
          %s749 = scalar_lea.vmem [#allocation4], 12
          %750 = vst.msk [vmem:[%s749] sm:$0xf] %vm556, %v747
        $region76: #{tpu_custom_call.1} parent=71 // pred_fallthru
          _
        %s751 = smul.u32 %s32, 8
        %s752 = scalar_lea.vmem %s449, %s751
        %v753 = vld [vmem:[%s752] sm:$0xff]
        %s754 = sshra.s32 %s751, 3
        %s755 = sand.u32 %s751, 7
        %s756 = smul.addr %s754, 4
        %s757 = scalar_lea.vmem [#allocation2], %s756
        %v758 = vld [vmem:[%s757] sm:$0xf]
        %v759 = vld [vmem:[%s757 + $0x4] sm:$0xf]
        %v760 = vld [vmem:[%s757 + $0x8] sm:$0xf]
        %v761 = vld [vmem:[%s757 + $0xc] sm:$0xf]
        %v762 = vld [vmem:[#allocation3] sm:$0xf]
        %v763 = vld [vmem:[#allocation3 + $0x4] sm:$0xf]
        %v764 = vld [vmem:[#allocation3 + $0x8] sm:$0xf]
        %v765 = vld [vmem:[#allocation3 + $0xc] sm:$0xf]
        %vm766 = vcmask 64512
        %v768 = vsel %vm766, %v758, 0
        %vm770 = vcmask 1043456
        %v772 = vsel %vm770, %v762, 0
        %774 = vmatprep.subr.bf16.mxu0 0
        %775 = vmatpush1.bf16.msra.mxu0 %v772
        %776 = vmatprep.subr.bf16.mxu0 0
        %777 = vmatpush1.bf16.msra.mxu0 0
        %778 = vmatprep.subr.bf16.mxu0 0
        %779 = vmatpush1.bf16.msra.mxu0 0
        %780 = vmatprep.subr.bf16.mxu0 0
        %781 = vmatpush1.bf16.msra.mxu0 0
        %782 = vmatprep.subr.bf16.mxu0 0
        %783 = vmatpush1.bf16.msra.mxu0 0
        %784 = vmatprep.subr.bf16.mxu0 0
        %785 = vmatpush1.bf16.msra.mxu0 0
        %786 = vmatprep.subr.bf16.mxu0 0
        %787 = vmatpush1.bf16.msra.mxu0 0
        %788 = vmatprep.subr.bf16.mxu0 0
        %789 = vmatpush1.bf16.msra.mxu0 0
        %790 = vmatprep.subr.bf16.mxu0 0
        %791 = vmatpush1.bf16.msra.mxu0 0
        %792 = vmatprep.subr.bf16.mxu0 0
        %793 = vmatpush1.bf16.msra.mxu0 0
        %794 = vmatprep.subr.bf16.mxu0 0
        %795 = vmatpush1.bf16.msra.mxu0 0
        %796 = vmatprep.subr.bf16.mxu0 0
        %797 = vmatpush1.bf16.msra.mxu0 0
        %798 = vmatprep.subr.bf16.mxu0 0
        %799 = vmatpush1.bf16.msra.mxu0 0
        %800 = vmatprep.subr.bf16.mxu0 0
        %801 = vmatpush1.bf16.msra.mxu0 0
        %802 = vmatprep.subr.bf16.mxu0 0
        %803 = vmatpush1.bf16.msra.mxu0 0
        %804 = vmatprep.subr.bf16.mxu0 0
        %805 = vmatpush1.bf16.msra.mxu0 0
        %806 = vmatprep.mubr.bf16.mxu0 0
        %807 = vmatmul.mubr.bf16.gmra.mrb[0].mxu0 %v768
        %v808 = vpop.f32.mrb[0].mxu0
        %v809 = vadd.f32 0.0, %v808
        %v810 = vpop.f32.mrb[0].mxu0
        %v811 = vpop.f32.mrb[0].mxu0
        %v812 = vpop.f32.mrb[0].mxu0
        %813 = vdwg.mxu0
        %v815 = vsel %vm766, %v759, 0
        %v818 = vsel %vm770, %v763, 0
        %820 = vmatprep.subr.bf16.mxu0 0
        %821 = vmatpush1.bf16.msra.mxu0 %v818
        %822 = vmatprep.subr.bf16.mxu0 0
        %823 = vmatpush1.bf16.msra.mxu0 0
        %824 = vmatprep.subr.bf16.mxu0 0
        %825 = vmatpush1.bf16.msra.mxu0 0
        %826 = vmatprep.subr.bf16.mxu0 0
        %827 = vmatpush1.bf16.msra.mxu0 0
        %828 = vmatprep.subr.bf16.mxu0 0
        %829 = vmatpush1.bf16.msra.mxu0 0
        %830 = vmatprep.subr.bf16.mxu0 0
        %831 = vmatpush1.bf16.msra.mxu0 0
        %832 = vmatprep.subr.bf16.mxu0 0
        %833 = vmatpush1.bf16.msra.mxu0 0
        %834 = vmatprep.subr.bf16.mxu0 0
        %835 = vmatpush1.bf16.msra.mxu0 0
        %836 = vmatprep.subr.bf16.mxu0 0
        %837 = vmatpush1.bf16.msra.mxu0 0
        %838 = vmatprep.subr.bf16.mxu0 0
        %839 = vmatpush1.bf16.msra.mxu0 0
        %840 = vmatprep.subr.bf16.mxu0 0
        %841 = vmatpush1.bf16.msra.mxu0 0
        %842 = vmatprep.subr.bf16.mxu0 0
        %843 = vmatpush1.bf16.msra.mxu0 0
        %844 = vmatprep.subr.bf16.mxu0 0
        %845 = vmatpush1.bf16.msra.mxu0 0
        %846 = vmatprep.subr.bf16.mxu0 0
        %847 = vmatpush1.bf16.msra.mxu0 0
        %848 = vmatprep.subr.bf16.mxu0 0
        %849 = vmatpush1.bf16.msra.mxu0 0
        %850 = vmatprep.subr.bf16.mxu0 0
        %851 = vmatpush1.bf16.msra.mxu0 0
        %852 = vmatprep.mubr.bf16.mxu0 0
        %853 = vmatmul.mubr.bf16.gmra.mrb[0].mxu0 %v815
        %v854 = vpop.f32.mrb[0].mxu0
        %v855 = vadd.f32 0.0, %v854
        %v856 = vpop.f32.mrb[0].mxu0
        %v857 = vpop.f32.mrb[0].mxu0
        %v858 = vpop.f32.mrb[0].mxu0
        %859 = vdwg.mxu0
        %v861 = vsel %vm766, %v760, 0
        %v864 = vsel %vm770, %v764, 0
        %866 = vmatprep.subr.bf16.mxu0 0
        %867 = vmatpush1.bf16.msra.mxu0 %v864
        %868 = vmatprep.subr.bf16.mxu0 0
        %869 = vmatpush1.bf16.msra.mxu0 0
        %870 = vmatprep.subr.bf16.mxu0 0
        %871 = vmatpush1.bf16.msra.mxu0 0
        %872 = vmatprep.subr.bf16.mxu0 0
        %873 = vmatpush1.bf16.msra.mxu0 0
        %874 = vmatprep.subr.bf16.mxu0 0
        %875 = vmatpush1.bf16.msra.mxu0 0
        %876 = vmatprep.subr.bf16.mxu0 0
        %877 = vmatpush1.bf16.msra.mxu0 0
        %878 = vmatprep.subr.bf16.mxu0 0
        %879 = vmatpush1.bf16.msra.mxu0 0
        %880 = vmatprep.subr.bf16.mxu0 0
        %881 = vmatpush1.bf16.msra.mxu0 0
        %882 = vmatprep.subr.bf16.mxu0 0
        %883 = vmatpush1.bf16.msra.mxu0 0
        %884 = vmatprep.subr.bf16.mxu0 0
        %885 = vmatpush1.bf16.msra.mxu0 0
        %886 = vmatprep.subr.bf16.mxu0 0
        %887 = vmatpush1.bf16.msra.mxu0 0
        %888 = vmatprep.subr.bf16.mxu0 0
        %889 = vmatpush1.bf16.msra.mxu0 0
        %890 = vmatprep.subr.bf16.mxu0 0
        %891 = vmatpush1.bf16.msra.mxu0 0
        %892 = vmatprep.subr.bf16.mxu0 0
        %893 = vmatpush1.bf16.msra.mxu0 0
        %894 = vmatprep.subr.bf16.mxu0 0
        %895 = vmatpush1.bf16.msra.mxu0 0
        %896 = vmatprep.subr.bf16.mxu0 0
        %897 = vmatpush1.bf16.msra.mxu0 0
        %898 = vmatprep.mubr.bf16.mxu0 0
        %899 = vmatmul.mubr.bf16.gmra.mrb[0].mxu0 %v861
        %v900 = vpop.f32.mrb[0].mxu0
        %v901 = vadd.f32 0.0, %v900
        %v902 = vpop.f32.mrb[0].mxu0
        %v903 = vpop.f32.mrb[0].mxu0
        %v904 = vpop.f32.mrb[0].mxu0
        %905 = vdwg.mxu0
        %v907 = vsel %vm766, %v761, 0
        %v910 = vsel %vm770, %v765, 0
        %912 = vmatprep.subr.bf16.mxu0 0
        %913 = vmatpush1.bf16.msra.mxu0 %v910
        %914 = vmatprep.subr.bf16.mxu0 0
        %915 = vmatpush1.bf16.msra.mxu0 0
        %916 = vmatprep.subr.bf16.mxu0 0
        %917 = vmatpush1.bf16.msra.mxu0 0
        %918 = vmatprep.subr.bf16.mxu0 0
        %919 = vmatpush1.bf16.msra.mxu0 0
        %920 = vmatprep.subr.bf16.mxu0 0
        %921 = vmatpush1.bf16.msra.mxu0 0
        %922 = vmatprep.subr.bf16.mxu0 0
        %923 = vmatpush1.bf16.msra.mxu0 0
        %924 = vmatprep.subr.bf16.mxu0 0
        %925 = vmatpush1.bf16.msra.mxu0 0
        %926 = vmatprep.subr.bf16.mxu0 0
        %927 = vmatpush1.bf16.msra.mxu0 0
        %928 = vmatprep.subr.bf16.mxu0 0
        %929 = vmatpush1.bf16.msra.mxu0 0
        %930 = vmatprep.subr.bf16.mxu0 0
        %931 = vmatpush1.bf16.msra.mxu0 0
        %932 = vmatprep.subr.bf16.mxu0 0
        %933 = vmatpush1.bf16.msra.mxu0 0
        %934 = vmatprep.subr.bf16.mxu0 0
        %935 = vmatpush1.bf16.msra.mxu0 0
        %936 = vmatprep.subr.bf16.mxu0 0
        %937 = vmatpush1.bf16.msra.mxu0 0
        %938 = vmatprep.subr.bf16.mxu0 0
        %939 = vmatpush1.bf16.msra.mxu0 0
        %940 = vmatprep.subr.bf16.mxu0 0
        %941 = vmatpush1.bf16.msra.mxu0 0
        %942 = vmatprep.subr.bf16.mxu0 0
        %943 = vmatpush1.bf16.msra.mxu0 0
        %944 = vmatprep.mubr.bf16.mxu0 0
        %945 = vmatmul.mubr.bf16.gmra.mrb[0].mxu0 %v907
        %v946 = vpop.f32.mrb[0].mxu0
        %v947 = vadd.f32 0.0, %v946
        %v948 = vpop.f32.mrb[0].mxu0
        %v949 = vpop.f32.mrb[0].mxu0
        %v950 = vpop.f32.mrb[0].mxu0
        %951 = vdwg.mxu0
        %v952 = vlaneseq
        %v953 = vshrl.u32 %v952, 7
        %v954 = vstv %s751
        %v955 = vadd.s32 %v954, %v953
        %v956 = vlaneseq
        %v957 = vand.u32 %v956, 127
        %vm958 = vcmp.le.s32.totalorder %v957, %v955
        %v959 = vsel %vm958, 1, 0
        %vm960 = vcmp.eq.s32.totalorder %v959, 1
        %v961 = vsel %vm960, %v809, -1e+30
        %v962 = vsel %vm960, %v855, -1e+30
        %v963 = vsel %vm960, %v901, -1e+30
        %v964 = vsel %vm960, %v947, -1e+30
        %v965 = vsel %vm766, %v961, -inf
        %966 = vmax.xlane.f32.xlu0 %v965
        %v967 = vpop.xlane.xlu0 %966
        %v968 = vsel %vm766, %v962, -inf
        %969 = vmax.xlane.f32.xlu0 %v968
        %v970 = vpop.xlane.xlu0 %969
        %v971 = vsel %vm766, %v963, -inf
        %972 = vmax.xlane.f32.xlu0 %v971
        %v973 = vpop.xlane.xlu0 %972
        %v974 = vsel %vm766, %v964, -inf
        %975 = vmax.xlane.f32.xlu0 %v974
        %v976 = vpop.xlane.xlu0 %975
        %v977 = vsub.f32 %v961, %v967
        %v978 = vsub.f32 %v962, %v970
        %v979 = vsub.f32 %v963, %v973
        %v980 = vsub.f32 %v964, %v976
        %v981 = vpack.c.bf16 %v977, %v977
        %v982 = vpack.c.bf16 %v978, %v978
        %v983 = vpack.c.bf16 %v979, %v979
        %v984 = vpack.c.bf16 %v980, %v980
        %v986 = vmul.bf16 %v981, 1069105081
        %v987 = vpow.bf16.pop %v986
        %v989 = vmul.bf16 %v982, 1069105081
        %v990 = vpow.bf16.pop %v989
        %v992 = vmul.bf16 %v983, 1069105081
        %v993 = vpow.bf16.pop %v992
        %v995 = vmul.bf16 %v984, 1069105081
        %v996 = vpow.bf16.pop %v995
        %v997 = vunpack.c.l.bf16 %v987
        %v998 = vunpack.c.l.bf16 %v990
        %v999 = vunpack.c.l.bf16 %v993
        %v1000 = vunpack.c.l.bf16 %v996
        %v1001 = vsel %vm766, %v997, 0.0
        %1002 = vadd.xlane.f32.xlu0 %v1001
        %v1003 = vpop.xlane.xlu0 %1002
        %v1004 = vsel %vm766, %v998, 0.0
        %1005 = vadd.xlane.f32.xlu0 %v1004
        %v1006 = vpop.xlane.xlu0 %1005
        %v1007 = vsel %vm766, %v999, 0.0
        %1008 = vadd.xlane.f32.xlu0 %v1007
        %v1009 = vpop.xlane.xlu0 %1008
        %v1010 = vsel %vm766, %v1000, 0.0
        %1011 = vadd.xlane.f32.xlu0 %v1010
        %v1012 = vpop.xlane.xlu0 %1011
        %v1013 = vld [vmem:[#allocation4] sm:$0xf]
        %v1014 = vld [vmem:[#allocation4 + $0x4] sm:$0xf]
        %v1015 = vld [vmem:[#allocation4 + $0x8] sm:$0xf]
        %v1016 = vld [vmem:[#allocation4 + $0xc] sm:$0xf]
        %v1018 = vsel %vm766, %v987, 0
        %v1021 = vsel %vm770, %v1013, 0
        %1023 = vmatprep.subr.bf16.mxu0 0
        %1024 = vmatpush1.bf16.msra.mxu0 %v1021
        %1025 = vmatprep.subr.bf16.mxu0 0
        %1026 = vmatpush1.bf16.msra.mxu0 0
        %1027 = vmatprep.subr.bf16.mxu0 0
        %1028 = vmatpush1.bf16.msra.mxu0 0
        %1029 = vmatprep.subr.bf16.mxu0 0
        %1030 = vmatpush1.bf16.msra.mxu0 0
        %1031 = vmatprep.subr.bf16.mxu0 0
        %1032 = vmatpush1.bf16.msra.mxu0 0
        %1033 = vmatprep.subr.bf16.mxu0 0
        %1034 = vmatpush1.bf16.msra.mxu0 0
        %1035 = vmatprep.subr.bf16.mxu0 0
        %1036 = vmatpush1.bf16.msra.mxu0 0
        %1037 = vmatprep.subr.bf16.mxu0 0
        %1038 = vmatpush1.bf16.msra.mxu0 0
        %1039 = vmatprep.subr.bf16.mxu0 0
        %1040 = vmatpush1.bf16.msra.mxu0 0
        %1041 = vmatprep.subr.bf16.mxu0 0
        %1042 = vmatpush1.bf16.msra.mxu0 0
        %1043 = vmatprep.subr.bf16.mxu0 0
        %1044 = vmatpush1.bf16.msra.mxu0 0
        %1045 = vmatprep.subr.bf16.mxu0 0
        %1046 = vmatpush1.bf16.msra.mxu0 0
        %1047 = vmatprep.subr.bf16.mxu0 0
        %1048 = vmatpush1.bf16.msra.mxu0 0
        %1049 = vmatprep.subr.bf16.mxu0 0
        %1050 = vmatpush1.bf16.msra.mxu0 0
        %1051 = vmatprep.subr.bf16.mxu0 0
        %1052 = vmatpush1.bf16.msra.mxu0 0
        %1053 = vmatprep.subr.bf16.mxu0 0
        %1054 = vmatpush1.bf16.msra.mxu0 0
        %1055 = vmatprep.mubr.bf16.mxu0 0
        %1056 = vmatmul.mubr.bf16.gmra.mrb[0].mxu0 %v1018
        %v1057 = vpop.f32.mrb[0].mxu0
        %v1058 = vadd.f32 0.0, %v1057
        %v1059 = vpop.f32.mrb[0].mxu0
        %v1060 = vpop.f32.mrb[0].mxu0
        %v1061 = vpop.f32.mrb[0].mxu0
        %1062 = vdwg.mxu0
        %v1064 = vsel %vm766, %v990, 0
        %v1067 = vsel %vm770, %v1014, 0
        %1069 = vmatprep.subr.bf16.mxu0 0
        %1070 = vmatpush1.bf16.msra.mxu0 %v1067
        %1071 = vmatprep.subr.bf16.mxu0 0
        %1072 = vmatpush1.bf16.msra.mxu0 0
        %1073 = vmatprep.subr.bf16.mxu0 0
        %1074 = vmatpush1.bf16.msra.mxu0 0
        %1075 = vmatprep.subr.bf16.mxu0 0
        %1076 = vmatpush1.bf16.msra.mxu0 0
        %1077 = vmatprep.subr.bf16.mxu0 0
        %1078 = vmatpush1.bf16.msra.mxu0 0
        %1079 = vmatprep.subr.bf16.mxu0 0
        %1080 = vmatpush1.bf16.msra.mxu0 0
        %1081 = vmatprep.subr.bf16.mxu0 0
        %1082 = vmatpush1.bf16.msra.mxu0 0
        %1083 = vmatprep.subr.bf16.mxu0 0
        %1084 = vmatpush1.bf16.msra.mxu0 0
        %1085 = vmatprep.subr.bf16.mxu0 0
        %1086 = vmatpush1.bf16.msra.mxu0 0
        %1087 = vmatprep.subr.bf16.mxu0 0
        %1088 = vmatpush1.bf16.msra.mxu0 0
        %1089 = vmatprep.subr.bf16.mxu0 0
        %1090 = vmatpush1.bf16.msra.mxu0 0
        %1091 = vmatprep.subr.bf16.mxu0 0
        %1092 = vmatpush1.bf16.msra.mxu0 0
        %1093 = vmatprep.subr.bf16.mxu0 0
        %1094 = vmatpush1.bf16.msra.mxu0 0
        %1095 = vmatprep.subr.bf16.mxu0 0
        %1096 = vmatpush1.bf16.msra.mxu0 0
        %1097 = vmatprep.subr.bf16.mxu0 0
        %1098 = vmatpush1.bf16.msra.mxu0 0
        %1099 = vmatprep.subr.bf16.mxu0 0
        %1100 = vmatpush1.bf16.msra.mxu0 0
        %1101 = vmatprep.mubr.bf16.mxu0 0
        %1102 = vmatmul.mubr.bf16.gmra.mrb[0].mxu0 %v1064
        %v1103 = vpop.f32.mrb[0].mxu0
        %v1104 = vadd.f32 0.0, %v1103
        %v1105 = vpop.f32.mrb[0].mxu0
        %v1106 = vpop.f32.mrb[0].mxu0
        %v1107 = vpop.f32.mrb[0].mxu0
        %1108 = vdwg.mxu0
        %v1110 = vsel %vm766, %v993, 0
        %v1113 = vsel %vm770, %v1015, 0
        %1115 = vmatprep.subr.bf16.mxu0 0
        %1116 = vmatpush1.bf16.msra.mxu0 %v1113
        %1117 = vmatprep.subr.bf16.mxu0 0
        %1118 = vmatpush1.bf16.msra.mxu0 0
        %1119 = vmatprep.subr.bf16.mxu0 0
        %1120 = vmatpush1.bf16.msra.mxu0 0
        %1121 = vmatprep.subr.bf16.mxu0 0
        %1122 = vmatpush1.bf16.msra.mxu0 0
        %1123 = vmatprep.subr.bf16.mxu0 0
        %1124 = vmatpush1.bf16.msra.mxu0 0
        %1125 = vmatprep.subr.bf16.mxu0 0
        %1126 = vmatpush1.bf16.msra.mxu0 0
        %1127 = vmatprep.subr.bf16.mxu0 0
        %1128 = vmatpush1.bf16.msra.mxu0 0
        %1129 = vmatprep.subr.bf16.mxu0 0
        %1130 = vmatpush1.bf16.msra.mxu0 0
        %1131 = vmatprep.subr.bf16.mxu0 0
        %1132 = vmatpush1.bf16.msra.mxu0 0
        %1133 = vmatprep.subr.bf16.mxu0 0
        %1134 = vmatpush1.bf16.msra.mxu0 0
        %1135 = vmatprep.subr.bf16.mxu0 0
        %1136 = vmatpush1.bf16.msra.mxu0 0
        %1137 = vmatprep.subr.bf16.mxu0 0
        %1138 = vmatpush1.bf16.msra.mxu0 0
        %1139 = vmatprep.subr.bf16.mxu0 0
        %1140 = vmatpush1.bf16.msra.mxu0 0
        %1141 = vmatprep.subr.bf16.mxu0 0
        %1142 = vmatpush1.bf16.msra.mxu0 0
        %1143 = vmatprep.subr.bf16.mxu0 0
        %1144 = vmatpush1.bf16.msra.mxu0 0
        %1145 = vmatprep.subr.bf16.mxu0 0
        %1146 = vmatpush1.bf16.msra.mxu0 0
        %1147 = vmatprep.mubr.bf16.mxu0 0
        %1148 = vmatmul.mubr.bf16.gmra.mrb[0].mxu0 %v1110
        %v1149 = vpop.f32.mrb[0].mxu0
        %v1150 = vadd.f32 0.0, %v1149
        %v1151 = vpop.f32.mrb[0].mxu0
        %v1152 = vpop.f32.mrb[0].mxu0
        %v1153 = vpop.f32.mrb[0].mxu0
        %1154 = vdwg.mxu0
        %v1156 = vsel %vm766, %v996, 0
        %v1159 = vsel %vm770, %v1016, 0
        %1161 = vmatprep.subr.bf16.mxu0 0
        %1162 = vmatpush1.bf16.msra.mxu0 %v1159
        %1163 = vmatprep.subr.bf16.mxu0 0
        %1164 = vmatpush1.bf16.msra.mxu0 0
        %1165 = vmatprep.subr.bf16.mxu0 0
        %1166 = vmatpush1.bf16.msra.mxu0 0
        %1167 = vmatprep.subr.bf16.mxu0 0
        %1168 = vmatpush1.bf16.msra.mxu0 0
        %1169 = vmatprep.subr.bf16.mxu0 0
        %1170 = vmatpush1.bf16.msra.mxu0 0
        %1171 = vmatprep.subr.bf16.mxu0 0
        %1172 = vmatpush1.bf16.msra.mxu0 0
        %1173 = vmatprep.subr.bf16.mxu0 0
        %1174 = vmatpush1.bf16.msra.mxu0 0
        %1175 = vmatprep.subr.bf16.mxu0 0
        %1176 = vmatpush1.bf16.msra.mxu0 0
        %1177 = vmatprep.subr.bf16.mxu0 0
        %1178 = vmatpush1.bf16.msra.mxu0 0
        %1179 = vmatprep.subr.bf16.mxu0 0
        %1180 = vmatpush1.bf16.msra.mxu0 0
        %1181 = vmatprep.subr.bf16.mxu0 0
        %1182 = vmatpush1.bf16.msra.mxu0 0
        %1183 = vmatprep.subr.bf16.mxu0 0
        %1184 = vmatpush1.bf16.msra.mxu0 0
        %1185 = vmatprep.subr.bf16.mxu0 0
        %1186 = vmatpush1.bf16.msra.mxu0 0
        %1187 = vmatprep.subr.bf16.mxu0 0
        %1188 = vmatpush1.bf16.msra.mxu0 0
        %1189 = vmatprep.subr.bf16.mxu0 0
        %1190 = vmatpush1.bf16.msra.mxu0 0
        %1191 = vmatprep.subr.bf16.mxu0 0
        %1192 = vmatpush1.bf16.msra.mxu0 0
        %1193 = vmatprep.mubr.bf16.mxu0 0
        %1194 = vmatmul.mubr.bf16.gmra.mrb[0].mxu0 %v1156
        %v1195 = vpop.f32.mrb[0].mxu0
        %v1196 = vadd.f32 0.0, %v1195
        %v1197 = vpop.f32.mrb[0].mxu0
        %v1198 = vpop.f32.mrb[0].mxu0
        %v1199 = vpop.f32.mrb[0].mxu0
        %1200 = vdwg.mxu0
        %v1201 = vrcp.pop %v1003
        %v1202 = vrcp.pop %v1006
        %v1203 = vrcp.pop %v1009
        %v1204 = vrcp.pop %v1012
        %v1205 = vmul.f32 %v1058, %v1201
        %v1206 = vmul.f32 %v1104, %v1202
        %v1207 = vmul.f32 %v1150, %v1203
        %v1208 = vmul.f32 %v1196, %v1204
        %v1209 = vld [vmem:[%s6] sm:$0x1]
        %v1211 = vlaneseq
        %v1212 = vshrl.u32 %v1211, 7
        %v1213 = vsub.s32 0, %v1212
        %v1214 = vrot.slane %v1209, %v1213
        %v1216 = vadd.f32 %v753, %v1214
        %v1217 = vpack.c.bf16 %v1205, %v1205
        %v1218 = vld [vmem:[%s5] sm:$0xf]
        %v1220 = vsel %vm766, %v1217, 0
        %v1223 = vsel %vm770, %v1218, 0
        %1225 = vmatprep.subr.bf16.mxu0 0
        %1226 = vmatpush1.bf16.msra.mxu0 %v1223
        %1227 = vmatprep.subr.bf16.mxu0 0
        %1228 = vmatpush1.bf16.msra.mxu0 0
        %1229 = vmatprep.subr.bf16.mxu0 0
        %1230 = vmatpush1.bf16.msra.mxu0 0
        %1231 = vmatprep.subr.bf16.mxu0 0
        %1232 = vmatpush1.bf16.msra.mxu0 0
        %1233 = vmatprep.subr.bf16.mxu0 0
        %1234 = vmatpush1.bf16.msra.mxu0 0
        %1235 = vmatprep.subr.bf16.mxu0 0
        %1236 = vmatpush1.bf16.msra.mxu0 0
        %1237 = vmatprep.subr.bf16.mxu0 0
        %1238 = vmatpush1.bf16.msra.mxu0 0
        %1239 = vmatprep.subr.bf16.mxu0 0
        %1240 = vmatpush1.bf16.msra.mxu0 0
        %1241 = vmatprep.subr.bf16.mxu0 0
        %1242 = vmatpush1.bf16.msra.mxu0 0
        %1243 = vmatprep.subr.bf16.mxu0 0
        %1244 = vmatpush1.bf16.msra.mxu0 0
        %1245 = vmatprep.subr.bf16.mxu0 0
        %1246 = vmatpush1.bf16.msra.mxu0 0
        %1247 = vmatprep.subr.bf16.mxu0 0
        %1248 = vmatpush1.bf16.msra.mxu0 0
        %1249 = vmatprep.subr.bf16.mxu0 0
        %1250 = vmatpush1.bf16.msra.mxu0 0
        %1251 = vmatprep.subr.bf16.mxu0 0
        %1252 = vmatpush1.bf16.msra.mxu0 0
        %1253 = vmatprep.subr.bf16.mxu0 0
        %1254 = vmatpush1.bf16.msra.mxu0 0
        %1255 = vmatprep.subr.bf16.mxu0 0
        %1256 = vmatpush1.bf16.msra.mxu0 0
        %1257 = vmatprep.mubr.bf16.mxu0 0
        %1258 = vmatmul.mubr.bf16.gmra.mrb[0].mxu0 %v1220
        %v1259 = vpop.f32.mrb[0].mxu0
        %v1260 = vadd.f32 0.0, %v1259
        %v1261 = vpop.f32.mrb[0].mxu0
        %v1262 = vpop.f32.mrb[0].mxu0
        %v1263 = vpop.f32.mrb[0].mxu0
        %1264 = vdwg.mxu0
        %v1265 = vadd.f32 %v1216, %v1260
        %v1266 = vpack.c.bf16 %v1206, %v1206
        %s1267 = scalar_lea.vmem %s5, 4
        %v1268 = vld [vmem:[%s1267] sm:$0xf]
        %v1270 = vsel %vm766, %v1266, 0
        %v1273 = vsel %vm770, %v1268, 0
        %1275 = vmatprep.subr.bf16.mxu0 0
        %1276 = vmatpush1.bf16.msra.mxu0 %v1273
        %1277 = vmatprep.subr.bf16.mxu0 0
        %1278 = vmatpush1.bf16.msra.mxu0 0
        %1279 = vmatprep.subr.bf16.mxu0 0
        %1280 = vmatpush1.bf16.msra.mxu0 0
        %1281 = vmatprep.subr.bf16.mxu0 0
        %1282 = vmatpush1.bf16.msra.mxu0 0
        %1283 = vmatprep.subr.bf16.mxu0 0
        %1284 = vmatpush1.bf16.msra.mxu0 0
        %1285 = vmatprep.subr.bf16.mxu0 0
        %1286 = vmatpush1.bf16.msra.mxu0 0
        %1287 = vmatprep.subr.bf16.mxu0 0
        %1288 = vmatpush1.bf16.msra.mxu0 0
        %1289 = vmatprep.subr.bf16.mxu0 0
        %1290 = vmatpush1.bf16.msra.mxu0 0
        %1291 = vmatprep.subr.bf16.mxu0 0
        %1292 = vmatpush1.bf16.msra.mxu0 0
        %1293 = vmatprep.subr.bf16.mxu0 0
        %1294 = vmatpush1.bf16.msra.mxu0 0
        %1295 = vmatprep.subr.bf16.mxu0 0
        %1296 = vmatpush1.bf16.msra.mxu0 0
        %1297 = vmatprep.subr.bf16.mxu0 0
        %1298 = vmatpush1.bf16.msra.mxu0 0
        %1299 = vmatprep.subr.bf16.mxu0 0
        %1300 = vmatpush1.bf16.msra.mxu0 0
        %1301 = vmatprep.subr.bf16.mxu0 0
        %1302 = vmatpush1.bf16.msra.mxu0 0
        %1303 = vmatprep.subr.bf16.mxu0 0
        %1304 = vmatpush1.bf16.msra.mxu0 0
        %1305 = vmatprep.subr.bf16.mxu0 0
        %1306 = vmatpush1.bf16.msra.mxu0 0
        %1307 = vmatprep.mubr.bf16.mxu0 0
        %1308 = vmatmul.mubr.bf16.gmra.mrb[0].mxu0 %v1270
        %v1309 = vpop.f32.mrb[0].mxu0
        %v1310 = vadd.f32 0.0, %v1309
        %v1311 = vpop.f32.mrb[0].mxu0
        %v1312 = vpop.f32.mrb[0].mxu0
        %v1313 = vpop.f32.mrb[0].mxu0
        %1314 = vdwg.mxu0
        %v1315 = vadd.f32 %v1265, %v1310
        %v1316 = vpack.c.bf16 %v1207, %v1207
        %s1317 = scalar_lea.vmem %s5, 8
        %v1318 = vld [vmem:[%s1317] sm:$0xf]
        %v1320 = vsel %vm766, %v1316, 0
        %v1323 = vsel %vm770, %v1318, 0
        %1325 = vmatprep.subr.bf16.mxu0 0
        %1326 = vmatpush1.bf16.msra.mxu0 %v1323
        %1327 = vmatprep.subr.bf16.mxu0 0
        %1328 = vmatpush1.bf16.msra.mxu0 0
        %1329 = vmatprep.subr.bf16.mxu0 0
        %1330 = vmatpush1.bf16.msra.mxu0 0
        %1331 = vmatprep.subr.bf16.mxu0 0
        %1332 = vmatpush1.bf16.msra.mxu0 0
        %1333 = vmatprep.subr.bf16.mxu0 0
        %1334 = vmatpush1.bf16.msra.mxu0 0
        %1335 = vmatprep.subr.bf16.mxu0 0
        %1336 = vmatpush1.bf16.msra.mxu0 0
        %1337 = vmatprep.subr.bf16.mxu0 0
        %1338 = vmatpush1.bf16.msra.mxu0 0
        %1339 = vmatprep.subr.bf16.mxu0 0
        %1340 = vmatpush1.bf16.msra.mxu0 0
        %1341 = vmatprep.subr.bf16.mxu0 0
        %1342 = vmatpush1.bf16.msra.mxu0 0
        %1343 = vmatprep.subr.bf16.mxu0 0
        %1344 = vmatpush1.bf16.msra.mxu0 0
        %1345 = vmatprep.subr.bf16.mxu0 0
        %1346 = vmatpush1.bf16.msra.mxu0 0
        %1347 = vmatprep.subr.bf16.mxu0 0
        %1348 = vmatpush1.bf16.msra.mxu0 0
        %1349 = vmatprep.subr.bf16.mxu0 0
        %1350 = vmatpush1.bf16.msra.mxu0 0
        %1351 = vmatprep.subr.bf16.mxu0 0
        %1352 = vmatpush1.bf16.msra.mxu0 0
        %1353 = vmatprep.subr.bf16.mxu0 0
        %1354 = vmatpush1.bf16.msra.mxu0 0
        %1355 = vmatprep.subr.bf16.mxu0 0
        %1356 = vmatpush1.bf16.msra.mxu0 0
        %1357 = vmatprep.mubr.bf16.mxu0 0
        %1358 = vmatmul.mubr.bf16.gmra.mrb[0].mxu0 %v1320
        %v1359 = vpop.f32.mrb[0].mxu0
        %v1360 = vadd.f32 0.0, %v1359
        %v1361 = vpop.f32.mrb[0].mxu0
        %v1362 = vpop.f32.mrb[0].mxu0
        %v1363 = vpop.f32.mrb[0].mxu0
        %1364 = vdwg.mxu0
        %v1365 = vadd.f32 %v1315, %v1360
        %v1366 = vpack.c.bf16 %v1208, %v1208
        %s1367 = scalar_lea.vmem %s5, 12
        %v1368 = vld [vmem:[%s1367] sm:$0xf]
        %v1370 = vsel %vm766, %v1366, 0
        %v1373 = vsel %vm770, %v1368, 0
        %1375 = vmatprep.subr.bf16.mxu0 0
        %1376 = vmatpush1.bf16.msra.mxu0 %v1373
        %1377 = vmatprep.subr.bf16.mxu0 0
        %1378 = vmatpush1.bf16.msra.mxu0 0
        %1379 = vmatprep.subr.bf16.mxu0 0
        %1380 = vmatpush1.bf16.msra.mxu0 0
        %1381 = vmatprep.subr.bf16.mxu0 0
        %1382 = vmatpush1.bf16.msra.mxu0 0
        %1383 = vmatprep.subr.bf16.mxu0 0
        %1384 = vmatpush1.bf16.msra.mxu0 0
        %1385 = vmatprep.subr.bf16.mxu0 0
        %1386 = vmatpush1.bf16.msra.mxu0 0
        %1387 = vmatprep.subr.bf16.mxu0 0
        %1388 = vmatpush1.bf16.msra.mxu0 0
        %1389 = vmatprep.subr.bf16.mxu0 0
        %1390 = vmatpush1.bf16.msra.mxu0 0
        %1391 = vmatprep.subr.bf16.mxu0 0
        %1392 = vmatpush1.bf16.msra.mxu0 0
        %1393 = vmatprep.subr.bf16.mxu0 0
        %1394 = vmatpush1.bf16.msra.mxu0 0
        %1395 = vmatprep.subr.bf16.mxu0 0
        %1396 = vmatpush1.bf16.msra.mxu0 0
        %1397 = vmatprep.subr.bf16.mxu0 0
        %1398 = vmatpush1.bf16.msra.mxu0 0
        %1399 = vmatprep.subr.bf16.mxu0 0
        %1400 = vmatpush1.bf16.msra.mxu0 0
        %1401 = vmatprep.subr.bf16.mxu0 0
        %1402 = vmatpush1.bf16.msra.mxu0 0
        %1403 = vmatprep.subr.bf16.mxu0 0
        %1404 = vmatpush1.bf16.msra.mxu0 0
        %1405 = vmatprep.subr.bf16.mxu0 0
        %1406 = vmatpush1.bf16.msra.mxu0 0
        %1407 = vmatprep.mubr.bf16.mxu0 0
        %1408 = vmatmul.mubr.bf16.gmra.mrb[0].mxu0 %v1370
        %v1409 = vpop.f32.mrb[0].mxu0
        %v1410 = vadd.f32 0.0, %v1409
        %v1411 = vpop.f32.mrb[0].mxu0
        %v1412 = vpop.f32.mrb[0].mxu0
        %v1413 = vpop.f32.mrb[0].mxu0
        %1414 = vdwg.mxu0
        %v1415 = vadd.f32 %v1365, %v1410
        %v1416 = vld [vmem:[%s7] sm:$0x1]
        %v1417 = vld [vmem:[%s8] sm:$0x1]
        %vm1418 = vcmask 261120
        %v1419 = vsel %vm1418, %v1415, 0.0
        %1420 = vadd.xlane.f32.xlu0 %v1419
        %v1421 = vpop.xlane.xlu0 %1420
        %v1422 = vrcp.pop 32.0
        %v1423 = vmul.f32 %v1421, %v1422
        %v1424 = vsub.f32 %v1415, %v1423
        %v1425 = vmul.f32 %v1424, %v1424
        %v1426 = vsel %vm1418, %v1425, 0.0
        %1427 = vadd.xlane.f32.xlu0 %v1426
        %v1428 = vpop.xlane.xlu0 %1427
        %v1429 = vmul.f32 %v1428, %v1422
        %v1430 = vadd.f32 %v1429, 1e-05
        %v1431 = vrsqrt.pop %v1430
        %v1432 = vmul.f32 %v1424, %v1431
        %v1434 = vlaneseq
        %v1435 = vshrl.u32 %v1434, 7
        %v1436 = vsub.s32 0, %v1435
        %v1437 = vrot.slane %v1416, %v1436
        %v1439 = vmul.f32 %v1432, %v1437
        %v1441 = vlaneseq
        %v1442 = vshrl.u32 %v1441, 7
        %v1443 = vsub.s32 0, %v1442
        %v1444 = vrot.slane %v1417, %v1443
        %v1446 = vadd.f32 %v1439, %v1444
        %v1447 = vpack.c.bf16 %v1446, %v1446
        %v1448 = vld [vmem:[%s9] sm:$0xf]
        %v1449 = vld [vmem:[%s9 + $0x4] sm:$0xf]
        %v1450 = vld [vmem:[%s9 + $0x8] sm:$0xf]
        %v1451 = vld [vmem:[%s9 + $0xc] sm:$0xf]
        %v1452 = vld [vmem:[%s10] sm:$0x1]
        %v1454 = vlaneseq
        %v1455 = vshrl.u32 %v1454, 7
        %v1456 = vsub.s32 0, %v1455
        %v1457 = vrot.slane %v1452, %v1456
        %v1463 = vunpack.c.l.b16 %v1448
        %v1464 = vunpack.c.l.b16 %v1449
        %v1465 = vunpack.c.l.b16 %v1450
        %v1466 = vunpack.c.l.b16 %v1451
        %v1467 = vpack.c.b16 %v1464, %v1463
        %v1468 = vpack.c.b16 %v1466, %v1465
        %v1472 = vsel %vm1418, %v1447, 0
        %1474 = vmatprep.subr.bf16.mxu0 0
        %1475 = vmatpush1.bf16.msra.mxu0 %v1467
        %1476 = vmatprep.subr.bf16.mxu0 0
        %1477 = vmatpush1.bf16.msra.mxu0 %v1468
        %1478 = vmatprep.subr.bf16.mxu0 0
        %1479 = vmatpush1.bf16.msra.mxu0 0
        %1480 = vmatprep.subr.bf16.mxu0 0
        %1481 = vmatpush1.bf16.msra.mxu0 0
        %1482 = vmatprep.subr.bf16.mxu0 0
        %1483 = vmatpush1.bf16.msra.mxu0 0
        %1484 = vmatprep.subr.bf16.mxu0 0
        %1485 = vmatpush1.bf16.msra.mxu0 0
        %1486 = vmatprep.subr.bf16.mxu0 0
        %1487 = vmatpush1.bf16.msra.mxu0 0
        %1488 = vmatprep.subr.bf16.mxu0 0
        %1489 = vmatpush1.bf16.msra.mxu0 0
        %1490 = vmatprep.subr.bf16.mxu0 0
        %1491 = vmatpush1.bf16.msra.mxu0 0
        %1492 = vmatprep.subr.bf16.mxu0 0
        %1493 = vmatpush1.bf16.msra.mxu0 0
        %1494 = vmatprep.subr.bf16.mxu0 0
        %1495 = vmatpush1.bf16.msra.mxu0 0
        %1496 = vmatprep.subr.bf16.mxu0 0
        %1497 = vmatpush1.bf16.msra.mxu0 0
        %1498 = vmatprep.subr.bf16.mxu0 0
        %1499 = vmatpush1.bf16.msra.mxu0 0
        %1500 = vmatprep.subr.bf16.mxu0 0
        %1501 = vmatpush1.bf16.msra.mxu0 0
        %1502 = vmatprep.subr.bf16.mxu0 0
        %1503 = vmatpush1.bf16.msra.mxu0 0
        %1504 = vmatprep.subr.bf16.mxu0 0
        %1505 = vmatpush1.bf16.msra.mxu0 0
        %1506 = vmatprep.mubr.bf16.mxu0 0
        %1507 = vmatmul.mubr.bf16.gmra.mrb[0].mxu0 %v1472
        %v1508 = vpop.f32.mrb[0].mxu0
        %v1509 = vadd.f32 %v1457, %v1508
        %v1510 = vpop.f32.mrb[0].mxu0
        %v1511 = vpop.f32.mrb[0].mxu0
        %v1512 = vpop.f32.mrb[0].mxu0
        %1513 = vdwg.mxu0
        %v1514 = vmul.f32 %v1509, %v1509
        %v1515 = vmul.f32 %v1509, %v1514
        %v1516 = vmul.f32 %v1515, 0.044715
        %v1517 = vadd.f32 %v1509, %v1516
        %v1518 = vmul.f32 %v1517, 0.7978846
        %v1519 = vtanh.pop %v1518
        %v1520 = vadd.f32 %v1519, 1.0
        %v1521 = vmul.f32 %v1520, 0.5
        %v1522 = vmul.f32 %v1509, %v1521
        %v1523 = vpack.c.bf16 %v1522, %v1522
        %v1524 = vld [vmem:[%s11] sm:$0xf]
        %v1525 = vld [vmem:[%s11 + $0x4] sm:$0xf]
        %v1526 = vld [vmem:[%s11 + $0x8] sm:$0xf]
        %v1527 = vld [vmem:[%s11 + $0xc] sm:$0xf]
        %v1528 = vld [vmem:[%s11 + $0x10] sm:$0xf]
        %v1529 = vld [vmem:[%s11 + $0x14] sm:$0xf]
        %v1530 = vld [vmem:[%s11 + $0x18] sm:$0xf]
        %v1531 = vld [vmem:[%s11 + $0x1c] sm:$0xf]
        %v1532 = vld [vmem:[%s11 + $0x20] sm:$0xf]
        %v1533 = vld [vmem:[%s11 + $0x24] sm:$0xf]
        %v1534 = vld [vmem:[%s11 + $0x28] sm:$0xf]
        %v1535 = vld [vmem:[%s11 + $0x2c] sm:$0xf]
        %v1536 = vld [vmem:[%s11 + $0x30] sm:$0xf]
        %v1537 = vld [vmem:[%s11 + $0x34] sm:$0xf]
        %v1538 = vld [vmem:[%s11 + $0x38] sm:$0xf]
        %v1539 = vld [vmem:[%s11 + $0x3c] sm:$0xf]
        %v1540 = vld [vmem:[%s12] sm:$0x1]
        %v1542 = vlaneseq
        %v1543 = vshrl.u32 %v1542, 7
        %v1544 = vsub.s32 0, %v1543
        %v1545 = vrot.slane %v1540, %v1544
        %v1563 = vunpack.c.l.b16 %v1524
        %v1564 = vunpack.c.l.b16 %v1525
        %v1565 = vunpack.c.l.b16 %v1526
        %v1566 = vunpack.c.l.b16 %v1527
        %v1567 = vunpack.c.l.b16 %v1528
        %v1568 = vunpack.c.l.b16 %v1529
        %v1569 = vunpack.c.l.b16 %v1530
        %v1570 = vunpack.c.l.b16 %v1531
        %v1571 = vunpack.c.l.b16 %v1532
        %v1572 = vunpack.c.l.b16 %v1533
        %v1573 = vunpack.c.l.b16 %v1534
        %v1574 = vunpack.c.l.b16 %v1535
        %v1575 = vunpack.c.l.b16 %v1536
        %v1576 = vunpack.c.l.b16 %v1537
        %v1577 = vunpack.c.l.b16 %v1538
        %v1578 = vunpack.c.l.b16 %v1539
        %v1579 = vpack.c.b16 %v1564, %v1563
        %v1580 = vpack.c.b16 %v1566, %v1565
        %v1581 = vpack.c.b16 %v1568, %v1567
        %v1582 = vpack.c.b16 %v1570, %v1569
        %v1583 = vpack.c.b16 %v1572, %v1571
        %v1584 = vpack.c.b16 %v1574, %v1573
        %v1585 = vpack.c.b16 %v1576, %v1575
        %v1586 = vpack.c.b16 %v1578, %v1577
        %1595 = vmatprep.subr.bf16.mxu0 0
        %1596 = vmatpush1.bf16.msra.mxu0 %v1579
        %1597 = vmatprep.subr.bf16.mxu0 0
        %1598 = vmatpush1.bf16.msra.mxu0 %v1580
        %1599 = vmatprep.subr.bf16.mxu0 0
        %1600 = vmatpush1.bf16.msra.mxu0 %v1581
        %1601 = vmatprep.subr.bf16.mxu0 0
        %1602 = vmatpush1.bf16.msra.mxu0 %v1582
        %1603 = vmatprep.subr.bf16.mxu0 0
        %1604 = vmatpush1.bf16.msra.mxu0 %v1583
        %1605 = vmatprep.subr.bf16.mxu0 0
        %1606 = vmatpush1.bf16.msra.mxu0 %v1584
        %1607 = vmatprep.subr.bf16.mxu0 0
        %1608 = vmatpush1.bf16.msra.mxu0 %v1585
        %1609 = vmatprep.subr.bf16.mxu0 0
        %1610 = vmatpush1.bf16.msra.mxu0 %v1586
        %1611 = vmatprep.subr.bf16.mxu0 0
        %1612 = vmatpush1.bf16.msra.mxu0 0
        %1613 = vmatprep.subr.bf16.mxu0 0
        %1614 = vmatpush1.bf16.msra.mxu0 0
        %1615 = vmatprep.subr.bf16.mxu0 0
        %1616 = vmatpush1.bf16.msra.mxu0 0
        %1617 = vmatprep.subr.bf16.mxu0 0
        %1618 = vmatpush1.bf16.msra.mxu0 0
        %1619 = vmatprep.subr.bf16.mxu0 0
        %1620 = vmatpush1.bf16.msra.mxu0 0
        %1621 = vmatprep.subr.bf16.mxu0 0
        %1622 = vmatpush1.bf16.msra.mxu0 0
        %1623 = vmatprep.subr.bf16.mxu0 0
        %1624 = vmatpush1.bf16.msra.mxu0 0
        %1625 = vmatprep.subr.bf16.mxu0 0
        %1626 = vmatpush1.bf16.msra.mxu0 0
        %1627 = vmatprep.mubr.bf16.mxu0 0
        %1628 = vmatmul.mubr.bf16.gmra.mrb[0].mxu0 %v1523
        %v1629 = vpop.f32.mrb[0].mxu0
        %v1630 = vadd.f32 %v1545, %v1629
        %v1631 = vpop.f32.mrb[0].mxu0
        %v1632 = vpop.f32.mrb[0].mxu0
        %v1633 = vpop.f32.mrb[0].mxu0
        %1634 = vdwg.mxu0
        %v1635 = vadd.f32 %v1415, %v1630
        %1636 = vst.msk [vmem:[%s445] sm:$0xff] %vm1418, %v1635
        %s1637 = sand.u32 %s327, 1
        %s1638 = scalar_lea.sflag [#allocation6], %s1637
        %s1639 = sand.u32 %s327, 1
        %s1640 = smul.addr %s1639, 8
        %s1641 = scalar_lea.vmem [#allocation5], %s1640
        // Predicated region
        $region77: #{tpu_custom_call.1} parent=71 // pred_check
          %p1642 = pneg %p337
        $region78: #{tpu_custom_call.1} parent=71 // pred_check_branch
          %1644 = sbr.rel (%p1642) target = $region80
        $region79: #{tpu_custom_call.1} parent=71 // pred_region
          %s1646 = ssub.s32 128, 128
          %1647 = vsyncadd %s1638, %s1646
          %s1648 = sadd.s32 %s32, %s31
          %s1649 = smul.addr %s1648, 128
          %s1650 = scalar_lea.hbm %s13, %s1649
          %s1652 = sshll.u32 %s1641, 4
          %s1653 = int_to_ptr.vmem [resolvable:$true] %s1652
          %1655 = dma.vmem_to_hbm [thread:$0]  %s1653, 128, %s1650, %s1638
        $region80: #{tpu_custom_call.1} parent=71 // pred_fallthru
          _
      $region72: #{tpu_custom_call.1} parent=5 // pred_fallthru
        _
      %p1656 = scmp.le.s32.totalorder 2, %s22
      // Predicated region
      $region81: #{tpu_custom_call.1} parent=5 // pred_check
        %p1657 = pneg %p1656
      $region82: #{tpu_custom_call.1} parent=5 // pred_check_branch
        %1659 = sbr.rel (%p1657) target = $region84
      $region83: #{tpu_custom_call.1} parent=5 // pred_region
        %s1660 = ssub.s32 %s22, 2
        // Predicated region
        $region85: #{tpu_custom_call.1} parent=83 // pred_check
          %p1661 = pneg %p343
        $region86: #{tpu_custom_call.1} parent=83 // pred_check_branch
          %1663 = sbr.rel (%p1661) target = $region88
        $region87: #{tpu_custom_call.1} parent=83 // pred_region
          %s1664 = sand.u32 %s328, 1
          %s1665 = scalar_lea.sflag [#allocation6], %s1664
          %s1666 = sand.u32 %s328, 1
          %s1667 = smul.addr %s1666, 8
          %s1668 = scalar_lea.vmem [#allocation5], %s1667
          %1669 = dma.done %s1665, 128
        $region88: #{tpu_custom_call.1} parent=83 // pred_fallthru
          _
      $region84: #{tpu_custom_call.1} parent=5 // pred_fallthru
        _
    $region6: #{tpu_custom_call.1} parent=1 // loop_footer
      %s26 = sadd.s32 1, %s22
    $region7: #{tpu_custom_call.1} parent=1 // loop_footer_branch
      %21 = sbr.rel target = $region3
    $region8: #{tpu_custom_call.1} parent=1 // loop_exit
      _
    %1670 = vsyncpa [#allocation6], 1
    %s1671 = scalar_lea.sflag [#allocation6], 1
    %1672 = vsyncpa %s1671, 1

</llo_original>
